<compile_context>
chip_gen: v6e
topology: v6e:2x2x1
jax: 0.10.0
libtpu: 0.0.40
codegen_flags: <defaults>
</compile_context>

<pallas_src>
import functools

import jax
import jax.numpy as jnp
from jax.experimental import pallas as pl
from jax.experimental.pallas import tpu as pltpu

WIDTH = 6                     # -> width - 2 = 4 hidden (Linear, Tanh) blocks
DEPTH = 50                    # hidden size
NUM_HIDDEN = WIDTH - 2
IN_DIM = 3
OUT_DIM = 1

# Padded sizes for clean (8, 128) tiling.
DEPTH_PAD = 64
IN_PAD = 8
OUT_PAD = 8


def _round_up(a: int, m: int) -> int:
    return (a + m - 1) // m * m


def _mlp_kernel(inp_ref, w_in_ref, b_in_ref, hw_ref, hb_ref,
                w_out_ref, b_out_ref, out_ref):
    """Full MLP forward for one (*, tm) tile of batch columns.

    Feature-major: activations are (feature, batch); batch is on the lane axis.
    Weight refs are bf16, biases f32; matmuls accumulate in f32.
    """
    # Input layer (no activation, matches the PyTorch forward).
    h = jnp.dot(w_in_ref[...], inp_ref[...],
                preferred_element_type=jnp.float32) + b_in_ref[...]
    # Hidden blocks: Linear -> tanh.  NUM_HIDDEN is a compile-time constant.
    for l in range(NUM_HIDDEN):
        h = jnp.tanh(
            jnp.dot(hw_ref[l], h.astype(jnp.bfloat16),
                    preferred_element_type=jnp.float32) + hb_ref[l])
    # Output layer (rows >= OUT_DIM are zero-padded and dropped in the wrapper).
    out_ref[...] = jnp.dot(w_out_ref[...], h.astype(jnp.bfloat16),
                           preferred_element_type=jnp.float32) + b_out_ref[...]


@functools.partial(jax.jit, static_argnames=("tm",))
def pinn_forward(x, y, t, params, *, tm=2048):
    """x, y, t: (B, 1) float32.  Returns (B, 1) float32.

    params are in PyTorch-native layouts:
      w_in (50, 3), b_in (50,), hw (4, 50, 50), hb (4, 50), w_out (1, 50), b_out (1,)
    """
    w_in, b_in, hw, hb, w_out, b_out = params
    B = x.shape[0]

    # Row tile: multiple of 128 lanes, clamped to the (padded) batch.
    tm = _round_up(int(tm), 128)
    tm_eff = min(tm, _round_up(B, 128))
    B_pad = _round_up(B, tm_eff)
    grid = (B_pad // tm_eff,)

    # Feature-major input stack, zero-padded to (IN_PAD, B_pad), bf16 for the MXU.
    inp = jnp.concatenate((x, y, t), axis=1).T                       # (3, B) f32
    inp = jnp.pad(inp, ((0, IN_PAD - IN_DIM), (0, B_pad - B)))
    inp = inp.astype(jnp.bfloat16)

    # Zero-pad weights/biases to the tiled sizes; weights pre-cast to bf16.
    w_in_p = (jnp.zeros((DEPTH_PAD, IN_PAD), jnp.float32)
              .at[:DEPTH, :IN_DIM].set(w_in).astype(jnp.bfloat16))
    b_in_p = jnp.zeros((DEPTH_PAD, 1), jnp.float32).at[:DEPTH, 0].set(b_in)
    hw_p = (jnp.zeros((NUM_HIDDEN, DEPTH_PAD, DEPTH_PAD), jnp.float32)
            .at[:, :DEPTH, :DEPTH].set(hw).astype(jnp.bfloat16))
    hb_p = (jnp.zeros((NUM_HIDDEN, DEPTH_PAD, 1), jnp.float32)
            .at[:, :DEPTH, 0].set(hb))
    w_out_p = (jnp.zeros((OUT_PAD, DEPTH_PAD), jnp.float32)
               .at[:OUT_DIM, :DEPTH].set(w_out).astype(jnp.bfloat16))
    b_out_p = jnp.zeros((OUT_PAD, 1), jnp.float32).at[:OUT_DIM, 0].set(b_out)

    out = pl.pallas_call(
        _mlp_kernel,
        out_shape=jax.ShapeDtypeStruct((OUT_PAD, B_pad), jnp.float32),
        grid_spec=pltpu.PrefetchScalarGridSpec(
            num_scalar_prefetch=0,
            grid=grid,
            in_specs=[
                pl.BlockSpec((IN_PAD, tm_eff), lambda i: (0, i)),          # input tile
                pl.BlockSpec((DEPTH_PAD, IN_PAD), lambda i: (0, 0)),       # w_in
                pl.BlockSpec((DEPTH_PAD, 1), lambda i: (0, 0)),            # b_in
                pl.BlockSpec((NUM_HIDDEN, DEPTH_PAD, DEPTH_PAD),
                             lambda i: (0, 0, 0)),                         # hidden W
                pl.BlockSpec((NUM_HIDDEN, DEPTH_PAD, 1),
                             lambda i: (0, 0, 0)),                         # hidden b
                pl.BlockSpec((OUT_PAD, DEPTH_PAD), lambda i: (0, 0)),      # w_out
                pl.BlockSpec((OUT_PAD, 1), lambda i: (0, 0)),              # b_out
            ],
            out_specs=pl.BlockSpec((OUT_PAD, tm_eff), lambda i: (0, i)),   # lane-dense
        ),
        compiler_params=pltpu.CompilerParams(
            dimension_semantics=("parallel",)),
    )(inp, w_in_p, b_in_p, hw_p, hb_p, w_out_p, b_out_p)

    # Row 0 holds the real output; drop padded rows/columns, return (B, 1).
    return out[0, :B].reshape(B, 1)


def init_params(key):
    """Deterministic init matching the PyTorch module's shapes (native layout).

    nn.Linear weight: kaiming_normal_(nonlinearity='tanh') -> std = (5/3)/sqrt(fan_in)
    nn.Linear bias:   default uniform(-1/sqrt(fan_in), 1/sqrt(fan_in))
    """
    gain = 5.0 / 3.0
    keys = jax.random.split(key, 2 + 2 * NUM_HIDDEN + 2)
    ki = iter(keys)

    def kaiming(k, fan_out, fan_in):
        std = gain / jnp.sqrt(jnp.float32(fan_in))
        return std * jax.random.normal(k, (fan_out, fan_in), jnp.float32)

    def bias(k, fan_out, fan_in):
        bound = 1.0 / jnp.sqrt(jnp.float32(fan_in))
        return jax.random.uniform(k, (fan_out,), jnp.float32, -bound, bound)

    w_in = kaiming(next(ki), DEPTH, IN_DIM)
    b_in = bias(next(ki), DEPTH, IN_DIM)
    hw = jnp.stack([kaiming(next(ki), DEPTH, DEPTH) for _ in range(NUM_HIDDEN)])
    hb = jnp.stack([bias(next(ki), DEPTH, DEPTH) for _ in range(NUM_HIDDEN)])
    w_out = kaiming(next(ki), OUT_DIM, DEPTH)   # synthetic init for the output layer
    b_out = bias(next(ki), OUT_DIM, DEPTH)
    return (w_in, b_in, hw, hb, w_out, b_out)


def reference_forward(x, y, t, params, matmul_dtype=jnp.float32):
    """Pure-JAX reference of the same forward pass (batch-major, for verification).

    matmul_dtype=bfloat16 mirrors the kernel's bf16-operand / f32-accumulate math.
    """
    w_in, b_in, hw, hb, w_out, b_out = params
    md = matmul_dtype
    inp = jnp.concatenate((x, y, t), axis=1)
    h = jnp.dot(inp.astype(md), w_in.T.astype(md),
                preferred_element_type=jnp.float32) + b_in
    for l in range(NUM_HIDDEN):
        h = jnp.tanh(jnp.dot(h.astype(md), hw[l].T.astype(md),
                             preferred_element_type=jnp.float32) + hb[l])
    return jnp.dot(h.astype(md), w_out.T.astype(md),
                   preferred_element_type=jnp.float32) + b_out


if __name__ == "__main__":
    key = jax.random.PRNGKey(0)
    k_p, k_x, k_y, k_t = jax.random.split(key, 4)

    params = init_params(k_p)

    # Small stand-in for the N**3 collocation batch; deliberately NOT a
    # multiple of the tile so the padding path is exercised (grid of 2 tiles).
    B = 1000
    sigma = 0.5
    x = jax.random.uniform(k_x, (B, 1), jnp.float32, -1.0, 1.0)
    y = jax.random.uniform(k_y, (B, 1), jnp.float32, -sigma, sigma)
    t = jax.random.uniform(k_t, (B, 1), jnp.float32, 0.0, 10.0)

    out = jax.block_until_ready(pinn_forward(x, y, t, params, tm=512))
    assert out.shape == (B, 1)

    # Tight check against a reference with identical bf16-operand numerics.
    ref_bf16 = reference_forward(x, y, t, params, matmul_dtype=jnp.bfloat16)
    assert jnp.allclose(out, ref_bf16, atol=1e-3, rtol=1e-3), \
        "mismatch vs. bf16-matmul JAX reference"
    # Loose sanity check against the exact f32 forward (bf16 rounding only).
    ref_f32 = reference_forward(x, y, t, params, matmul_dtype=jnp.float32)
    assert jnp.allclose(out, ref_f32, atol=1e-1, rtol=1e-1), \
        "gross mismatch vs. f32 JAX reference"

    # TODO(synk): the autograd-based PDE losses / LBFGS training loop and the
    # plotting utilities are host-side training logic, not part of the module's
    # forward pass, so they are not ported.
    print("KERNEL_OK")
</pallas_src>

<mosaic_0001>
module attributes {stable_mosaic.version = 11 : i64} {
  func.func @_mlp_kernel(%arg0: i32, %arg1: memref<8x512xbf16, #tpu.memory_space<vmem>>, %arg2: memref<64x8xbf16, #tpu.memory_space<vmem>>, %arg3: memref<64x1xf32, #tpu.memory_space<vmem>>, %arg4: memref<4x64x64xbf16, #tpu.memory_space<vmem>>, %arg5: memref<4x64x1xf32, #tpu.memory_space<vmem>>, %arg6: memref<8x64xbf16, #tpu.memory_space<vmem>>, %arg7: memref<8x1xf32, #tpu.memory_space<vmem>>, %arg8: memref<8x512xf32, #tpu.memory_space<vmem>>) attributes {dimension_semantics = [#tpu.dimension_semantics<parallel>], iteration_bounds = array<i64: 2>, scalar_prefetch = 0 : i64, scratch_operands = 0 : i64, tpu.core_type = #tpu.core_type<tc>, window_params = [{transform_indices = @transform_0, window_bounds = array<i64: 8, 512>}, {pipeline_mode = #tpu.pipeline_mode<synchronous>, transform_indices = @transform_1, window_bounds = array<i64: 64, 8>}, {pipeline_mode = #tpu.pipeline_mode<synchronous>, transform_indices = @transform_2, window_bounds = array<i64: 64, 1>}, {pipeline_mode = #tpu.pipeline_mode<synchronous>, transform_indices = @transform_3, window_bounds = array<i64: 4, 64, 64>}, {pipeline_mode = #tpu.pipeline_mode<synchronous>, transform_indices = @transform_4, window_bounds = array<i64: 4, 64, 1>}, {pipeline_mode = #tpu.pipeline_mode<synchronous>, transform_indices = @transform_5, window_bounds = array<i64: 8, 64>}, {pipeline_mode = #tpu.pipeline_mode<synchronous>, transform_indices = @transform_6, window_bounds = array<i64: 8, 1>}, {transform_indices = @transform_7, window_bounds = array<i64: 8, 512>}]} {
    %c0 = arith.constant 0 : index
    %c0_0 = arith.constant 0 : index
    %0 = vector.load %arg2[%c0, %c0_0] : memref<64x8xbf16, #tpu.memory_space<vmem>>, vector<64x8xbf16>
    %c0_1 = arith.constant 0 : index
    %c0_2 = arith.constant 0 : index
    %1 = vector.load %arg1[%c0_1, %c0_2] : memref<8x512xbf16, #tpu.memory_space<vmem>>, vector<8x512xbf16>
    %cst = arith.constant dense<0.000000e+00> : vector<64x512xf32>
    %2 = tpu.matmul %0, %1, %cst {dimension_numbers = #tpu.dot_dimension_numbers<[1], [0], [0], [1], [0, 0, 1, 1], [], []>} : vector<64x8xbf16>, vector<8x512xbf16>, vector<64x512xf32> -> vector<64x512xf32>
    %c0_3 = arith.constant 0 : index
    %c0_4 = arith.constant 0 : index
    %3 = vector.load %arg3[%c0_3, %c0_4] : memref<64x1xf32, #tpu.memory_space<vmem>>, vector<64x1xf32>
    %4 = vector.broadcast %3 : vector<64x1xf32> to vector<64x512xf32>
    %5 = arith.addf %2, %4 : vector<64x512xf32>
    %c0_5 = arith.constant 0 : index
    %c0_6 = arith.constant 0 : index
    %c0_7 = arith.constant 0 : index
    %6 = vector.load %arg4[%c0_5, %c0_6, %c0_7] : memref<4x64x64xbf16, #tpu.memory_space<vmem>>, vector<1x64x64xbf16>
    %7 = vector.shape_cast %6 : vector<1x64x64xbf16> to vector<64x64xbf16>
    %8 = arith.truncf %5 : vector<64x512xf32> to vector<64x512xbf16>
    %cst_8 = arith.constant dense<0.000000e+00> : vector<64x512xf32>
    %9 = tpu.matmul %7, %8, %cst_8 {dimension_numbers = #tpu.dot_dimension_numbers<[1], [0], [0], [1], [0, 0, 1, 1], [], []>} : vector<64x64xbf16>, vector<64x512xbf16>, vector<64x512xf32> -> vector<64x512xf32>
    %c0_9 = arith.constant 0 : index
    %c0_10 = arith.constant 0 : index
    %c0_11 = arith.constant 0 : index
    %10 = vector.load %arg5[%c0_9, %c0_10, %c0_11] : memref<4x64x1xf32, #tpu.memory_space<vmem>>, vector<1x64x1xf32>
    %11 = vector.shape_cast %10 : vector<1x64x1xf32> to vector<64x1xf32>
    %12 = vector.broadcast %11 : vector<64x1xf32> to vector<64x512xf32>
    %13 = arith.addf %9, %12 : vector<64x512xf32>
    %14 = math.tanh %13 : vector<64x512xf32>
    %c1 = arith.constant 1 : index
    %c0_12 = arith.constant 0 : index
    %c0_13 = arith.constant 0 : index
    %15 = vector.load %arg4[%c1, %c0_12, %c0_13] : memref<4x64x64xbf16, #tpu.memory_space<vmem>>, vector<1x64x64xbf16>
    %16 = vector.shape_cast %15 : vector<1x64x64xbf16> to vector<64x64xbf16>
    %17 = arith.truncf %14 : vector<64x512xf32> to vector<64x512xbf16>
    %cst_14 = arith.constant dense<0.000000e+00> : vector<64x512xf32>
    %18 = tpu.matmul %16, %17, %cst_14 {dimension_numbers = #tpu.dot_dimension_numbers<[1], [0], [0], [1], [0, 0, 1, 1], [], []>} : vector<64x64xbf16>, vector<64x512xbf16>, vector<64x512xf32> -> vector<64x512xf32>
    %c1_15 = arith.constant 1 : index
    %c0_16 = arith.constant 0 : index
    %c0_17 = arith.constant 0 : index
    %19 = vector.load %arg5[%c1_15, %c0_16, %c0_17] : memref<4x64x1xf32, #tpu.memory_space<vmem>>, vector<1x64x1xf32>
    %20 = vector.shape_cast %19 : vector<1x64x1xf32> to vector<64x1xf32>
    %21 = vector.broadcast %20 : vector<64x1xf32> to vector<64x512xf32>
    %22 = arith.addf %18, %21 : vector<64x512xf32>
    %23 = math.tanh %22 : vector<64x512xf32>
    %c2 = arith.constant 2 : index
    %c0_18 = arith.constant 0 : index
    %c0_19 = arith.constant 0 : index
    %24 = vector.load %arg4[%c2, %c0_18, %c0_19] : memref<4x64x64xbf16, #tpu.memory_space<vmem>>, vector<1x64x64xbf16>
    %25 = vector.shape_cast %24 : vector<1x64x64xbf16> to vector<64x64xbf16>
    %26 = arith.truncf %23 : vector<64x512xf32> to vector<64x512xbf16>
    %cst_20 = arith.constant dense<0.000000e+00> : vector<64x512xf32>
    %27 = tpu.matmul %25, %26, %cst_20 {dimension_numbers = #tpu.dot_dimension_numbers<[1], [0], [0], [1], [0, 0, 1, 1], [], []>} : vector<64x64xbf16>, vector<64x512xbf16>, vector<64x512xf32> -> vector<64x512xf32>
    %c2_21 = arith.constant 2 : index
    %c0_22 = arith.constant 0 : index
    %c0_23 = arith.constant 0 : index
    %28 = vector.load %arg5[%c2_21, %c0_22, %c0_23] : memref<4x64x1xf32, #tpu.memory_space<vmem>>, vector<1x64x1xf32>
    %29 = vector.shape_cast %28 : vector<1x64x1xf32> to vector<64x1xf32>
    %30 = vector.broadcast %29 : vector<64x1xf32> to vector<64x512xf32>
    %31 = arith.addf %27, %30 : vector<64x512xf32>
    %32 = math.tanh %31 : vector<64x512xf32>
    %c3 = arith.constant 3 : index
    %c0_24 = arith.constant 0 : index
    %c0_25 = arith.constant 0 : index
    %33 = vector.load %arg4[%c3, %c0_24, %c0_25] : memref<4x64x64xbf16, #tpu.memory_space<vmem>>, vector<1x64x64xbf16>
    %34 = vector.shape_cast %33 : vector<1x64x64xbf16> to vector<64x64xbf16>
    %35 = arith.truncf %32 : vector<64x512xf32> to vector<64x512xbf16>
    %cst_26 = arith.constant dense<0.000000e+00> : vector<64x512xf32>
    %36 = tpu.matmul %34, %35, %cst_26 {dimension_numbers = #tpu.dot_dimension_numbers<[1], [0], [0], [1], [0, 0, 1, 1], [], []>} : vector<64x64xbf16>, vector<64x512xbf16>, vector<64x512xf32> -> vector<64x512xf32>
    %c3_27 = arith.constant 3 : index
    %c0_28 = arith.constant 0 : index
    %c0_29 = arith.constant 0 : index
    %37 = vector.load %arg5[%c3_27, %c0_28, %c0_29] : memref<4x64x1xf32, #tpu.memory_space<vmem>>, vector<1x64x1xf32>
    %38 = vector.shape_cast %37 : vector<1x64x1xf32> to vector<64x1xf32>
    %39 = vector.broadcast %38 : vector<64x1xf32> to vector<64x512xf32>
    %40 = arith.addf %36, %39 : vector<64x512xf32>
    %41 = math.tanh %40 : vector<64x512xf32>
    %c0_30 = arith.constant 0 : index
    %c0_31 = arith.constant 0 : index
    %42 = vector.load %arg6[%c0_30, %c0_31] : memref<8x64xbf16, #tpu.memory_space<vmem>>, vector<8x64xbf16>
    %43 = arith.truncf %41 : vector<64x512xf32> to vector<64x512xbf16>
    %cst_32 = arith.constant dense<0.000000e+00> : vector<8x512xf32>
    %44 = tpu.matmul %42, %43, %cst_32 {dimension_numbers = #tpu.dot_dimension_numbers<[1], [0], [0], [1], [0, 0, 1, 1], [], []>} : vector<8x64xbf16>, vector<64x512xbf16>, vector<8x512xf32> -> vector<8x512xf32>
    %c0_33 = arith.constant 0 : index
    %c0_34 = arith.constant 0 : index
    %45 = vector.load %arg7[%c0_33, %c0_34] : memref<8x1xf32, #tpu.memory_space<vmem>>, vector<8x1xf32>
    %46 = vector.broadcast %45 : vector<8x1xf32> to vector<8x512xf32>
    %47 = arith.addf %44, %46 : vector<8x512xf32>
    %c0_35 = arith.constant 0 : index
    %c0_36 = arith.constant 0 : index
    %48 = vector.load %arg8[%c0_35, %c0_36] : memref<8x512xf32, #tpu.memory_space<vmem>>, vector<8x512xf32>
    tpu.vector_store %arg8[%c0_35, %c0_36], %47 {strides = array<i32>} : memref<8x512xf32, #tpu.memory_space<vmem>>, vector<8x512xf32>,
    return
  }
  func.func @transform_0(%arg0: i32) -> (i32, i32) {
    %c0_i32 = arith.constant 0 : i32
    %c0_i32_0 = arith.constant 0 : i32
    return %c0_i32, %arg0 : i32, i32
  }
  func.func @transform_1(%arg0: i32) -> (i32, i32) {
    %c0_i32 = arith.constant 0 : i32
    %c0_i32_0 = arith.constant 0 : i32
    %c0_i32_1 = arith.constant 0 : i32
    return %c0_i32, %c0_i32_0 : i32, i32
  }
  func.func @transform_2(%arg0: i32) -> (i32, i32) {
    %c0_i32 = arith.constant 0 : i32
    %c0_i32_0 = arith.constant 0 : i32
    %c0_i32_1 = arith.constant 0 : i32
    return %c0_i32, %c0_i32_0 : i32, i32
  }
  func.func @transform_3(%arg0: i32) -> (i32, i32, i32) {
    %c0_i32 = arith.constant 0 : i32
    %c0_i32_0 = arith.constant 0 : i32
    %c0_i32_1 = arith.constant 0 : i32
    %c0_i32_2 = arith.constant 0 : i32
    return %c0_i32, %c0_i32_0, %c0_i32_1 : i32, i32, i32
  }
  func.func @transform_4(%arg0: i32) -> (i32, i32, i32) {
    %c0_i32 = arith.constant 0 : i32
    %c0_i32_0 = arith.constant 0 : i32
    %c0_i32_1 = arith.constant 0 : i32
    %c0_i32_2 = arith.constant 0 : i32
    return %c0_i32, %c0_i32_0, %c0_i32_1 : i32, i32, i32
  }
  func.func @transform_5(%arg0: i32) -> (i32, i32) {
    %c0_i32 = arith.constant 0 : i32
    %c0_i32_0 = arith.constant 0 : i32
    %c0_i32_1 = arith.constant 0 : i32
    return %c0_i32, %c0_i32_0 : i32, i32
  }
  func.func @transform_6(%arg0: i32) -> (i32, i32) {
    %c0_i32 = arith.constant 0 : i32
    %c0_i32_0 = arith.constant 0 : i32
    %c0_i32_1 = arith.constant 0 : i32
    return %c0_i32, %c0_i32_0 : i32, i32
  }
  func.func @transform_7(%arg0: i32) -> (i32, i32) {
    %c0_i32 = arith.constant 0 : i32
    %c0_i32_0 = arith.constant 0 : i32
    return %c0_i32, %arg0 : i32, i32
  }
}

</mosaic_0001>

<llo_original>
// kernel: pinn_forward.1
$region0: #{pinn_forward.1}
  #allocation0 [shape = 'u32[]', space=smem, size = 0x4, offset = 0x4, fixed_abs, tag = 'smem constant byte address 0x4 - core index']
  #allocation1 [shape = 'u32[144,128]{1,0:T(1,128)}', space=vmem, size = 0x12000, scoped, tag = 'internal scratch']
  %s0 = inlined_call_operand.vmem [shape: bf16[8,1024], index: 0, kind: input, shape index: {}]
  %s1 = inlined_call_operand.vmem [shape: bf16[64,8], index: 1, kind: input, shape index: {}]
  %s2 = inlined_call_operand.vmem [shape: f32[64,1], index: 2, kind: input, shape index: {}]
  %s3 = inlined_call_operand.vmem [shape: bf16[4,64,64], index: 3, kind: input, shape index: {}]
  %s4 = inlined_call_operand.vmem [shape: f32[4,64,1], index: 4, kind: input, shape index: {}]
  %s5 = inlined_call_operand.vmem [shape: bf16[8,64], index: 5, kind: input, shape index: {}]
  %s6 = inlined_call_operand.vmem [shape: f32[8,1], index: 6, kind: input, shape index: {}]
  %s7 = inlined_call_operand.vmem [shape: f32[8,1024], index: 7, kind: output, shape index: {}]
  %s8 = sld [smem:[#allocation0]]
  $region61: #{pinn_forward.1} parent=0
    _
  %s10 = ssub.s32 1, %s8
  %s11 = scalar_select 0, %s10, %s8
  loop: start=0, step=1, limit=4
  $region2: #{pinn_forward.1} parent=0 // loop_pre_header
    _
  $region3: #{pinn_forward.1} parent=0 // loop_header
    %s13 = sphi 0, %s17
    %p14 = scmp.ge.s32.totalorder %s13, 4
    %s23 = sphi 0, %s25
    %s26 = sphi 0, %s23
    %s27 = sphi 0, %s26
    %s43 = sphi 0, %s27
    %s47 = sphi 0, %s47
    %s49 = sphi 0, %s47
    %s50 = sphi 0, %s49
    %s64 = sphi 0, %s50
    %s68 = sphi 0, %s68
    %s70 = sphi 0, %s68
    %s71 = sphi 0, %s70
    %s85 = sphi 0, %s71
    %s89 = sphi 0, %s89
    %s91 = sphi 0, %s89
    %s92 = sphi 0, %s91
    %s106 = sphi 0, %s92
    %s110 = sphi 0, %s110
    %s112 = sphi 0, %s110
    %s113 = sphi 0, %s112
    %s127 = sphi 0, %s113
    %s131 = sphi 0, %s131
    %s133 = sphi 0, %s131
    %s134 = sphi 0, %s133
    %s148 = sphi 0, %s134
    %s152 = sphi 0, %s152
    %s154 = sphi 0, %s152
    %s155 = sphi 0, %s154
    %s169 = sphi 0, %s155
    %s175 = sphi 0, %s177
    %s178 = sphi 0, %s175
    %s179 = sphi 0, %s178
    %s195 = sphi 0, %s179
  $region4: #{pinn_forward.1} parent=0 // loop_header_branch
    %16 = sbr.rel (%p14) target = $region8
  $region5: #{pinn_forward.1} parent=0 // loop_body
    %s18 = ssub.s32 %s13, 1
    %s19 = ssub.s32 %s13, 2
    %s20 = sadd.s32 %s13, 1
    %s21 = ssub.s32 %s13, %s20
    %p22 = scmp.eq.s32.totalorder %s21, 0
    %s24 = sadd.s32 %s23, 1
    %s25 = scalar_select %p22, %s23, %s24
    %p28 = pneg %p22
    %p29 = scmp.eq.s32.totalorder %s13, 1
    %p30 = por %p28, %p29
    %p31 = scmp.ne.s32.totalorder %s23, %s26
    %p32 = scmp.eq.s32.totalorder %s13, 0
    %p33 = por %p31, %p32
    %p34 = scmp.ne.s32.totalorder %s23, %s26
    %p35 = scmp.eq.s32.totalorder %s18, 1
    %p36 = por %p34, %p35
    %p37 = scmp.ne.s32.totalorder %s26, %s27
    %p38 = scmp.eq.s32.totalorder %s18, 0
    %p39 = por %p37, %p38
    %p40 = scmp.ne.s32.totalorder %s26, %s27
    %p41 = scmp.eq.s32.totalorder %s19, 1
    %p42 = por %p40, %p41
    %p44 = scmp.ne.s32.totalorder %s27, %s43
    %p45 = scmp.eq.s32.totalorder %s19, 0
    %p46 = por %p44, %p45
    %s48 = sadd.s32 %s47, 1
    %p51 = scmp.eq.s32.totalorder %s13, 1
    %p52 = scmp.ne.s32.totalorder %s47, %s49
    %p53 = scmp.eq.s32.totalorder %s13, 0
    %p54 = por %p52, %p53
    %p55 = scmp.ne.s32.totalorder %s47, %s49
    %p56 = scmp.eq.s32.totalorder %s18, 1
    %p57 = por %p55, %p56
    %p58 = scmp.ne.s32.totalorder %s49, %s50
    %p59 = scmp.eq.s32.totalorder %s18, 0
    %p60 = por %p58, %p59
    %p61 = scmp.ne.s32.totalorder %s49, %s50
    %p62 = scmp.eq.s32.totalorder %s19, 1
    %p63 = por %p61, %p62
    %p65 = scmp.ne.s32.totalorder %s50, %s64
    %p66 = scmp.eq.s32.totalorder %s19, 0
    %p67 = por %p65, %p66
    %s69 = sadd.s32 %s68, 1
    %p72 = scmp.eq.s32.totalorder %s13, 1
    %p73 = scmp.ne.s32.totalorder %s68, %s70
    %p74 = scmp.eq.s32.totalorder %s13, 0
    %p75 = por %p73, %p74
    %p76 = scmp.ne.s32.totalorder %s68, %s70
    %p77 = scmp.eq.s32.totalorder %s18, 1
    %p78 = por %p76, %p77
    %p79 = scmp.ne.s32.totalorder %s70, %s71
    %p80 = scmp.eq.s32.totalorder %s18, 0
    %p81 = por %p79, %p80
    %p82 = scmp.ne.s32.totalorder %s70, %s71
    %p83 = scmp.eq.s32.totalorder %s19, 1
    %p84 = por %p82, %p83
    %p86 = scmp.ne.s32.totalorder %s71, %s85
    %p87 = scmp.eq.s32.totalorder %s19, 0
    %p88 = por %p86, %p87
    %s90 = sadd.s32 %s89, 1
    %p93 = scmp.eq.s32.totalorder %s13, 1
    %p94 = scmp.ne.s32.totalorder %s89, %s91
    %p95 = scmp.eq.s32.totalorder %s13, 0
    %p96 = por %p94, %p95
    %p97 = scmp.ne.s32.totalorder %s89, %s91
    %p98 = scmp.eq.s32.totalorder %s18, 1
    %p99 = por %p97, %p98
    %p100 = scmp.ne.s32.totalorder %s91, %s92
    %p101 = scmp.eq.s32.totalorder %s18, 0
    %p102 = por %p100, %p101
    %p103 = scmp.ne.s32.totalorder %s91, %s92
    %p104 = scmp.eq.s32.totalorder %s19, 1
    %p105 = por %p103, %p104
    %p107 = scmp.ne.s32.totalorder %s92, %s106
    %p108 = scmp.eq.s32.totalorder %s19, 0
    %p109 = por %p107, %p108
    %s111 = sadd.s32 %s110, 1
    %p114 = scmp.eq.s32.totalorder %s13, 1
    %p115 = scmp.ne.s32.totalorder %s110, %s112
    %p116 = scmp.eq.s32.totalorder %s13, 0
    %p117 = por %p115, %p116
    %p118 = scmp.ne.s32.totalorder %s110, %s112
    %p119 = scmp.eq.s32.totalorder %s18, 1
    %p120 = por %p118, %p119
    %p121 = scmp.ne.s32.totalorder %s112, %s113
    %p122 = scmp.eq.s32.totalorder %s18, 0
    %p123 = por %p121, %p122
    %p124 = scmp.ne.s32.totalorder %s112, %s113
    %p125 = scmp.eq.s32.totalorder %s19, 1
    %p126 = por %p124, %p125
    %p128 = scmp.ne.s32.totalorder %s113, %s127
    %p129 = scmp.eq.s32.totalorder %s19, 0
    %p130 = por %p128, %p129
    %s132 = sadd.s32 %s131, 1
    %p135 = scmp.eq.s32.totalorder %s13, 1
    %p136 = scmp.ne.s32.totalorder %s131, %s133
    %p137 = scmp.eq.s32.totalorder %s13, 0
    %p138 = por %p136, %p137
    %p139 = scmp.ne.s32.totalorder %s131, %s133
    %p140 = scmp.eq.s32.totalorder %s18, 1
    %p141 = por %p139, %p140
    %p142 = scmp.ne.s32.totalorder %s133, %s134
    %p143 = scmp.eq.s32.totalorder %s18, 0
    %p144 = por %p142, %p143
    %p145 = scmp.ne.s32.totalorder %s133, %s134
    %p146 = scmp.eq.s32.totalorder %s19, 1
    %p147 = por %p145, %p146
    %p149 = scmp.ne.s32.totalorder %s134, %s148
    %p150 = scmp.eq.s32.totalorder %s19, 0
    %p151 = por %p149, %p150
    %s153 = sadd.s32 %s152, 1
    %p156 = scmp.eq.s32.totalorder %s13, 1
    %p157 = scmp.ne.s32.totalorder %s152, %s154
    %p158 = scmp.eq.s32.totalorder %s13, 0
    %p159 = por %p157, %p158
    %p160 = scmp.ne.s32.totalorder %s152, %s154
    %p161 = scmp.eq.s32.totalorder %s18, 1
    %p162 = por %p160, %p161
    %p163 = scmp.ne.s32.totalorder %s154, %s155
    %p164 = scmp.eq.s32.totalorder %s18, 0
    %p165 = por %p163, %p164
    %p166 = scmp.ne.s32.totalorder %s154, %s155
    %p167 = scmp.eq.s32.totalorder %s19, 1
    %p168 = por %p166, %p167
    %p170 = scmp.ne.s32.totalorder %s155, %s169
    %p171 = scmp.eq.s32.totalorder %s19, 0
    %p172 = por %p170, %p171
    %s173 = ssub.s32 %s13, %s20
    %p174 = scmp.eq.s32.totalorder %s173, 0
    %s176 = sadd.s32 %s175, 1
    %s177 = scalar_select %p174, %s175, %s176
    %p180 = pneg %p174
    %p181 = scmp.eq.s32.totalorder %s13, 1
    %p182 = por %p180, %p181
    %p183 = scmp.ne.s32.totalorder %s175, %s178
    %p184 = scmp.eq.s32.totalorder %s13, 0
    %p185 = por %p183, %p184
    %p186 = scmp.ne.s32.totalorder %s175, %s178
    %p187 = scmp.eq.s32.totalorder %s18, 1
    %p188 = por %p186, %p187
    %p189 = scmp.ne.s32.totalorder %s178, %s179
    %p190 = scmp.eq.s32.totalorder %s18, 0
    %p191 = por %p189, %p190
    %p192 = scmp.ne.s32.totalorder %s178, %s179
    %p193 = scmp.eq.s32.totalorder %s19, 1
    %p194 = por %p192, %p193
    %p196 = scmp.ne.s32.totalorder %s179, %s195
    %p197 = scmp.eq.s32.totalorder %s19, 0
    %p198 = por %p196, %p197
    %p199 = scmp.le.s32.totalorder 1, %s13
    %p200 = scmp.lt.s32.totalorder %s13, 3
    %p201 = pnand %p199, %p200
    %p202 = pneg %p201
    // Predicated region
    $region9: #{pinn_forward.1} parent=5 // pred_check
      _
    $region10: #{pinn_forward.1} parent=5 // pred_check_branch
      %204 = sbr.rel (%p201) target = $region12
    $region11: #{pinn_forward.1} parent=5 // pred_region
      %s205 = ssub.s32 %s13, 1
      // Predicated region
      $region13: #{pinn_forward.1} parent=11 // pred_check
        %p206 = pneg %p60
      $region14: #{pinn_forward.1} parent=11 // pred_check_branch
        %208 = sbr.rel (%p206) target = $region16
      $region15: #{pinn_forward.1} parent=11 // pred_region
        _
      $region16: #{pinn_forward.1} parent=11 // pred_fallthru
        _
      // Predicated region
      $region17: #{pinn_forward.1} parent=11 // pred_check
        %p209 = pneg %p81
      $region18: #{pinn_forward.1} parent=11 // pred_check_branch
        %211 = sbr.rel (%p209) target = $region20
      $region19: #{pinn_forward.1} parent=11 // pred_region
        _
      $region20: #{pinn_forward.1} parent=11 // pred_fallthru
        _
      // Predicated region
      $region21: #{pinn_forward.1} parent=11 // pred_check
        %p212 = pneg %p102
      $region22: #{pinn_forward.1} parent=11 // pred_check_branch
        %214 = sbr.rel (%p212) target = $region24
      $region23: #{pinn_forward.1} parent=11 // pred_region
        _
      $region24: #{pinn_forward.1} parent=11 // pred_fallthru
        _
      // Predicated region
      $region25: #{pinn_forward.1} parent=11 // pred_check
        %p215 = pneg %p123
      $region26: #{pinn_forward.1} parent=11 // pred_check_branch
        %217 = sbr.rel (%p215) target = $region28
      $region27: #{pinn_forward.1} parent=11 // pred_region
        _
      $region28: #{pinn_forward.1} parent=11 // pred_fallthru
        _
      // Predicated region
      $region29: #{pinn_forward.1} parent=11 // pred_check
        %p218 = pneg %p144
      $region30: #{pinn_forward.1} parent=11 // pred_check_branch
        %220 = sbr.rel (%p218) target = $region32
      $region31: #{pinn_forward.1} parent=11 // pred_region
        _
      $region32: #{pinn_forward.1} parent=11 // pred_fallthru
        _
      // Predicated region
      $region33: #{pinn_forward.1} parent=11 // pred_check
        %p221 = pneg %p165
      $region34: #{pinn_forward.1} parent=11 // pred_check_branch
        %223 = sbr.rel (%p221) target = $region36
      $region35: #{pinn_forward.1} parent=11 // pred_region
        _
      $region36: #{pinn_forward.1} parent=11 // pred_fallthru
        _
    $region12: #{pinn_forward.1} parent=5 // pred_fallthru
      _
    %p224 = scmp.lt.s32.totalorder %s13, 2
    // Predicated region
    $region37: #{pinn_forward.1} parent=5 // pred_check
      %p225 = pneg %p224
    $region38: #{pinn_forward.1} parent=5 // pred_check_branch
      %227 = sbr.rel (%p225) target = $region40
    $region39: #{pinn_forward.1} parent=5 // pred_region
      // Predicated region
      $region41: #{pinn_forward.1} parent=39 // pred_check
        %p228 = pneg %p33
      $region42: #{pinn_forward.1} parent=39 // pred_check_branch
        %230 = sbr.rel (%p228) target = $region44
      $region43: #{pinn_forward.1} parent=39 // pred_region
        %s231 = smul.u32 4, %s13
        %p232 = scmp.lt.s32.totalorder %s231, 7
        %s233 = scalar_select %p232, %s231, 7
        %s234 = smul.addr %s233, 4
        %s235 = scalar_lea.vmem %s0, %s234
        %s236 = smul.u32 4, %s13
      $region44: #{pinn_forward.1} parent=39 // pred_fallthru
        _
    $region40: #{pinn_forward.1} parent=5 // pred_fallthru
      _
    %p237 = scmp.le.s32.totalorder 1, %s13
    %p238 = scmp.lt.s32.totalorder %s13, 3
    %p239 = pnand %p237, %p238
    %p240 = pneg %p239
    // Predicated region
    $region45: #{pinn_forward.1} parent=5 // pred_check
      _
    $region46: #{pinn_forward.1} parent=5 // pred_check_branch
      %242 = sbr.rel (%p239) target = $region48
    $region47: #{pinn_forward.1} parent=5 // pred_region
      %s243 = ssub.s32 %s13, 1
      %s244 = smul.u32 4, %s18
      %p245 = scmp.lt.s32.totalorder %s244, 7
      %s246 = scalar_select %p245, %s244, 7
      %s247 = smul.addr %s246, 4
      %s248 = scalar_lea.vmem %s0, %s247
      %p249 = pneg %p39
      %p250 = pneg %p36
      %p251 = pneg %p60
      %p252 = pneg %p57
      %p253 = pneg %p81
      %p254 = pneg %p78
      %p255 = pneg %p102
      %p256 = pneg %p99
      %p257 = pneg %p123
      %p258 = pneg %p120
      %p259 = pneg %p144
      %p260 = pneg %p141
      %p261 = pneg %p165
      %p262 = pneg %p162
      %p263 = pneg %p191
      %p264 = pneg %p188
      %s265 = smul.u32 4, %s18
      %p266 = scmp.lt.s32.totalorder %s265, 7
      %s267 = scalar_select %p266, %s265, 7
      %s268 = smul.addr %s267, 8
      %s269 = scalar_lea.vmem %s7, %s268
      %s270 = smul.u32 4, %s18
      %p271 = scmp.lt.s32.totalorder %s270, 7
      %s272 = scalar_select %p271, %s270, 7
      %s273 = smul.addr %s272, 4
      %s274 = scalar_lea.vmem %s0, %s273
      %s275 = smul.u32 4, %s18
      %s276 = smul.u32 4, %s18
      %p277 = scmp.lt.s32.totalorder %s276, 7
      %s278 = scalar_select %p277, %s276, 7
      %s279 = smul.addr %s278, 8
      %s280 = scalar_lea.vmem %s7, %s279
      %s281 = smul.u32 4, %s18
      %v283 = vld [vmem:[%s1] sm:$0xf]
      %v284 = vld [vmem:[%s1 + $0x4] sm:$0xf]
      %v285 = vld [vmem:[%s1 + $0x8] sm:$0xf]
      %v286 = vld [vmem:[%s1 + $0xc] sm:$0xf]
      %v287 = vld [vmem:[%s1 + $0x10] sm:$0xf]
      %v288 = vld [vmem:[%s1 + $0x14] sm:$0xf]
      %v289 = vld [vmem:[%s1 + $0x18] sm:$0xf]
      %v290 = vld [vmem:[%s1 + $0x1c] sm:$0xf]
      %v291 = vld [vmem:[%s274] sm:$0xff]
      %v292 = vld [vmem:[%s274 + $0x8] sm:$0xff]
      %v293 = vld [vmem:[%s2] sm:$0xff]
      %v294 = vld [vmem:[%s2 + $0x8] sm:$0xff]
      %v295 = vld [vmem:[%s2 + $0x10] sm:$0xff]
      %v296 = vld [vmem:[%s2 + $0x18] sm:$0xff]
      %v297 = vld [vmem:[%s2 + $0x20] sm:$0xff]
      %v298 = vld [vmem:[%s2 + $0x28] sm:$0xff]
      %v299 = vld [vmem:[%s2 + $0x30] sm:$0xff]
      %v300 = vld [vmem:[%s2 + $0x38] sm:$0xff]
      %302 = vset.pattern.permute.xlu0 0
      %303 = vperm.xlu0 %302, %v293
      %v304 = vpop.permute.xlu0 %303
      %307 = vset.pattern.permute.xlu0 0
      %308 = vperm.xlu0 %307, %v294
      %v309 = vpop.permute.xlu0 %308
      %312 = vset.pattern.permute.xlu0 0
      %313 = vperm.xlu0 %312, %v295
      %v314 = vpop.permute.xlu0 %313
      %317 = vset.pattern.permute.xlu0 0
      %318 = vperm.xlu0 %317, %v296
      %v319 = vpop.permute.xlu0 %318
      %322 = vset.pattern.permute.xlu0 0
      %323 = vperm.xlu0 %322, %v297
      %v324 = vpop.permute.xlu0 %323
      %327 = vset.pattern.permute.xlu0 0
      %328 = vperm.xlu0 %327, %v298
      %v329 = vpop.permute.xlu0 %328
      %332 = vset.pattern.permute.xlu0 0
      %333 = vperm.xlu0 %332, %v299
      %v334 = vpop.permute.xlu0 %333
      %337 = vset.pattern.permute.xlu0 0
      %338 = vperm.xlu0 %337, %v300
      %v339 = vpop.permute.xlu0 %338
      %v349 = vunpack.c.l.b16 %v283
      %v350 = vunpack.c.l.b16 %v284
      %v351 = vunpack.c.l.b16 %v285
      %v352 = vunpack.c.l.b16 %v286
      %v353 = vunpack.c.l.b16 %v287
      %v354 = vunpack.c.l.b16 %v288
      %v355 = vunpack.c.l.b16 %v289
      %v356 = vunpack.c.l.b16 %v290
      %v357 = vpack.c.b16 %v350, %v349
      %v358 = vpack.c.b16 %v352, %v351
      %v359 = vpack.c.b16 %v354, %v353
      %v360 = vpack.c.b16 %v356, %v355
      %v363 = vunpack.c.l.b16 %v291
      %v364 = vunpack.c.h.b16 %v291
      %v365 = vunpack.c.l.b16 %v292
      %v366 = vunpack.c.h.b16 %v292
      %v367 = vpack.c.b16 %v363, %v363
      %v368 = vpack.c.b16 %v364, %v364
      %v369 = vpack.c.b16 %v365, %v365
      %v370 = vpack.c.b16 %v366, %v366
      %vm371 = vcmask 64512
      %v373 = vsel %vm371, %v357, 0
      %v376 = vsel %vm371, %v358, 0
      %v379 = vsel %vm371, %v359, 0
      %v382 = vsel %vm371, %v360, 0
      %vm384 = vcmask 1043456
      %v386 = vsel %vm384, %v367, 0
      %v389 = vsel %vm384, %v368, 0
      %v392 = vsel %vm384, %v369, 0
      %v395 = vsel %vm384, %v370, 0
      %397 = vmatprep.subr.bf16.mxu0 0
      %398 = vmatpush1.bf16.msra.mxu0 0
      %399 = vmatprep.subr.bf16.mxu0 0
      %400 = vmatpush1.bf16.msra.mxu0 0
      %401 = vmatprep.subr.bf16.mxu0 0
      %402 = vmatpush1.bf16.msra.mxu0 0
      %403 = vmatprep.subr.bf16.mxu0 0
      %404 = vmatpush1.bf16.msra.mxu0 0
      %405 = vmatprep.subr.bf16.mxu0 0
      %406 = vmatpush1.bf16.msra.mxu0 0
      %407 = vmatprep.subr.bf16.mxu0 0
      %408 = vmatpush1.bf16.msra.mxu0 0
      %409 = vmatprep.subr.bf16.mxu0 0
      %410 = vmatpush1.bf16.msra.mxu0 0
      %411 = vmatprep.subr.bf16.mxu0 %v389
      %412 = vmatpush1.bf16.msra.mxu0 %v386
      %413 = vmatprep.subr.bf16.mxu0 0
      %414 = vmatpush2.bf16.msra.mxu0 0
      %415 = vmatprep.subr.bf16.mxu0 0
      %416 = vmatpush2.bf16.msra.mxu0 0
      %417 = vmatprep.subr.bf16.mxu0 0
      %418 = vmatpush2.bf16.msra.mxu0 0
      %419 = vmatprep.subr.bf16.mxu0 0
      %420 = vmatpush2.bf16.msra.mxu0 0
      %421 = vmatprep.subr.bf16.mxu0 0
      %422 = vmatpush2.bf16.msra.mxu0 0
      %423 = vmatprep.subr.bf16.mxu0 0
      %424 = vmatpush2.bf16.msra.mxu0 0
      %425 = vmatprep.subr.bf16.mxu0 0
      %426 = vmatpush2.bf16.msra.mxu0 0
      %427 = vmatprep.subr.bf16.mxu0 0
      %428 = vmatpush2.bf16.msra.mxu0 0
      %429 = vmatprep.mubr.bf16.mxu0 0
      %430 = vmatmul.mubr.bf16.gmra.mxu0 %v373
      %v431 = vpop.f32.mrf.mxu0
      %v432 = vadd.f32 %v304, %v431
      %v433 = vpop.f32.mrf.mxu0
      %v434 = vadd.f32 %v304, %v433
      %v435 = vpop.f32.mrf.mxu0
      %v436 = vadd.f32 %v309, %v435
      %v437 = vpop.f32.mrf.mxu0
      %v438 = vadd.f32 %v309, %v437
      %439 = vmatprep.mubr.bf16.mxu0 0
      %440 = vmatmul.mubr.bf16.gmra.mxu0 %v376
      %v441 = vpop.f32.mrf.mxu0
      %v442 = vadd.f32 %v314, %v441
      %v443 = vpop.f32.mrf.mxu0
      %v444 = vadd.f32 %v314, %v443
      %v445 = vpop.f32.mrf.mxu0
      %v446 = vadd.f32 %v319, %v445
      %v447 = vpop.f32.mrf.mxu0
      %v448 = vadd.f32 %v319, %v447
      %449 = vmatprep.mubr.bf16.mxu0 0
      %450 = vmatmul.mubr.bf16.gmra.mxu0 %v379
      %v451 = vpop.f32.mrf.mxu0
      %v452 = vadd.f32 %v324, %v451
      %v453 = vpop.f32.mrf.mxu0
      %v454 = vadd.f32 %v324, %v453
      %v455 = vpop.f32.mrf.mxu0
      %v456 = vadd.f32 %v329, %v455
      %v457 = vpop.f32.mrf.mxu0
      %v458 = vadd.f32 %v329, %v457
      %459 = vmatprep.mubr.bf16.mxu0 0
      %460 = vmatmul.mubr.bf16.gmra.mxu0 %v382
      %v461 = vpop.f32.mrf.mxu0
      %v462 = vadd.f32 %v334, %v461
      %v463 = vpop.f32.mrf.mxu0
      %v464 = vadd.f32 %v334, %v463
      %v465 = vpop.f32.mrf.mxu0
      %v466 = vadd.f32 %v339, %v465
      %v467 = vpop.f32.mrf.mxu0
      %v468 = vadd.f32 %v339, %v467
      %469 = vdwg.mxu0
      %470 = vmatprep.subr.bf16.mxu0 0
      %471 = vmatpush1.bf16.msra.mxu0 0
      %472 = vmatprep.subr.bf16.mxu0 0
      %473 = vmatpush1.bf16.msra.mxu0 0
      %474 = vmatprep.subr.bf16.mxu0 0
      %475 = vmatpush1.bf16.msra.mxu0 0
      %476 = vmatprep.subr.bf16.mxu0 0
      %477 = vmatpush1.bf16.msra.mxu0 0
      %478 = vmatprep.subr.bf16.mxu0 0
      %479 = vmatpush1.bf16.msra.mxu0 0
      %480 = vmatprep.subr.bf16.mxu0 0
      %481 = vmatpush1.bf16.msra.mxu0 0
      %482 = vmatprep.subr.bf16.mxu0 0
      %483 = vmatpush1.bf16.msra.mxu0 0
      %484 = vmatprep.subr.bf16.mxu0 %v395
      %485 = vmatpush1.bf16.msra.mxu0 %v392
      %486 = vmatprep.subr.bf16.mxu0 0
      %487 = vmatpush2.bf16.msra.mxu0 0
      %488 = vmatprep.subr.bf16.mxu0 0
      %489 = vmatpush2.bf16.msra.mxu0 0
      %490 = vmatprep.subr.bf16.mxu0 0
      %491 = vmatpush2.bf16.msra.mxu0 0
      %492 = vmatprep.subr.bf16.mxu0 0
      %493 = vmatpush2.bf16.msra.mxu0 0
      %494 = vmatprep.subr.bf16.mxu0 0
      %495 = vmatpush2.bf16.msra.mxu0 0
      %496 = vmatprep.subr.bf16.mxu0 0
      %497 = vmatpush2.bf16.msra.mxu0 0
      %498 = vmatprep.subr.bf16.mxu0 0
      %499 = vmatpush2.bf16.msra.mxu0 0
      %500 = vmatprep.subr.bf16.mxu0 0
      %501 = vmatpush2.bf16.msra.mxu0 0
      %502 = vmatprep.mubr.bf16.mxu0 0
      %503 = vmatmul.mubr.bf16.gmra.mxu0 %v373
      %v504 = vpop.f32.mrf.mxu0
      %v505 = vadd.f32 %v304, %v504
      %v506 = vpop.f32.mrf.mxu0
      %v507 = vadd.f32 %v304, %v506
      %v508 = vpop.f32.mrf.mxu0
      %v509 = vadd.f32 %v309, %v508
      %v510 = vpop.f32.mrf.mxu0
      %v511 = vadd.f32 %v309, %v510
      %512 = vmatprep.mubr.bf16.mxu0 0
      %513 = vmatmul.mubr.bf16.gmra.mxu0 %v376
      %v514 = vpop.f32.mrf.mxu0
      %v515 = vadd.f32 %v314, %v514
      %v516 = vpop.f32.mrf.mxu0
      %v517 = vadd.f32 %v314, %v516
      %v518 = vpop.f32.mrf.mxu0
      %v519 = vadd.f32 %v319, %v518
      %v520 = vpop.f32.mrf.mxu0
      %v521 = vadd.f32 %v319, %v520
      %522 = vmatprep.mubr.bf16.mxu0 0
      %523 = vmatmul.mubr.bf16.gmra.mxu0 %v379
      %v524 = vpop.f32.mrf.mxu0
      %v525 = vadd.f32 %v324, %v524
      %v526 = vpop.f32.mrf.mxu0
      %v527 = vadd.f32 %v324, %v526
      %v528 = vpop.f32.mrf.mxu0
      %v529 = vadd.f32 %v329, %v528
      %v530 = vpop.f32.mrf.mxu0
      %v531 = vadd.f32 %v329, %v530
      %532 = vmatprep.mubr.bf16.mxu0 0
      %533 = vmatmul.mubr.bf16.gmra.mxu0 %v382
      %v534 = vpop.f32.mrf.mxu0
      %v535 = vadd.f32 %v334, %v534
      %v536 = vpop.f32.mrf.mxu0
      %v537 = vadd.f32 %v334, %v536
      %v538 = vpop.f32.mrf.mxu0
      %v539 = vadd.f32 %v339, %v538
      %v540 = vpop.f32.mrf.mxu0
      %v541 = vadd.f32 %v339, %v540
      %542 = vdwg.mxu0
      %v543 = vld [vmem:[%s3] sm:$0xf]
      %v544 = vld [vmem:[%s3 + $0x4] sm:$0xf]
      %v545 = vld [vmem:[%s3 + $0x8] sm:$0xf]
      %v546 = vld [vmem:[%s3 + $0xc] sm:$0xf]
      %v547 = vld [vmem:[%s3 + $0x10] sm:$0xf]
      %v548 = vld [vmem:[%s3 + $0x14] sm:$0xf]
      %v549 = vld [vmem:[%s3 + $0x18] sm:$0xf]
      %v550 = vld [vmem:[%s3 + $0x1c] sm:$0xf]
      %v551 = vpack.c.bf16 %v436, %v432
      %v552 = vpack.c.bf16 %v438, %v434
      %v553 = vpack.c.bf16 %v509, %v505
      %v554 = vpack.c.bf16 %v511, %v507
      %v555 = vpack.c.bf16 %v446, %v442
      %v556 = vpack.c.bf16 %v448, %v444
      %v557 = vpack.c.bf16 %v519, %v515
      %v558 = vpack.c.bf16 %v521, %v517
      %v559 = vpack.c.bf16 %v456, %v452
      %v560 = vpack.c.bf16 %v458, %v454
      %v561 = vpack.c.bf16 %v529, %v525
      %v562 = vpack.c.bf16 %v531, %v527
      %v563 = vpack.c.bf16 %v466, %v462
      %v564 = vpack.c.bf16 %v468, %v464
      %v565 = vpack.c.bf16 %v539, %v535
      %v566 = vpack.c.bf16 %v541, %v537
      %v567 = vld [vmem:[%s4] sm:$0xff]
      %v568 = vld [vmem:[%s4 + $0x8] sm:$0xff]
      %v569 = vld [vmem:[%s4 + $0x10] sm:$0xff]
      %v570 = vld [vmem:[%s4 + $0x18] sm:$0xff]
      %v571 = vld [vmem:[%s4 + $0x20] sm:$0xff]
      %v572 = vld [vmem:[%s4 + $0x28] sm:$0xff]
      %v573 = vld [vmem:[%s4 + $0x30] sm:$0xff]
      %v574 = vld [vmem:[%s4 + $0x38] sm:$0xff]
      %576 = vset.pattern.permute.xlu0 0
      %577 = vperm.xlu0 %576, %v567
      %v578 = vpop.permute.xlu0 %577
      %581 = vset.pattern.permute.xlu0 0
      %582 = vperm.xlu0 %581, %v568
      %v583 = vpop.permute.xlu0 %582
      %586 = vset.pattern.permute.xlu0 0
      %587 = vperm.xlu0 %586, %v569
      %v588 = vpop.permute.xlu0 %587
      %591 = vset.pattern.permute.xlu0 0
      %592 = vperm.xlu0 %591, %v570
      %v593 = vpop.permute.xlu0 %592
      %596 = vset.pattern.permute.xlu0 0
      %597 = vperm.xlu0 %596, %v571
      %v598 = vpop.permute.xlu0 %597
      %601 = vset.pattern.permute.xlu0 0
      %602 = vperm.xlu0 %601, %v572
      %v603 = vpop.permute.xlu0 %602
      %606 = vset.pattern.permute.xlu0 0
      %607 = vperm.xlu0 %606, %v573
      %v608 = vpop.permute.xlu0 %607
      %611 = vset.pattern.permute.xlu0 0
      %612 = vperm.xlu0 %611, %v574
      %v613 = vpop.permute.xlu0 %612
      %v623 = vunpack.c.l.b16 %v543
      %v624 = vunpack.c.l.b16 %v544
      %v625 = vunpack.c.l.b16 %v545
      %v626 = vunpack.c.l.b16 %v546
      %v627 = vunpack.c.l.b16 %v547
      %v628 = vunpack.c.l.b16 %v548
      %v629 = vunpack.c.l.b16 %v549
      %v630 = vunpack.c.l.b16 %v550
      %v631 = vpack.c.b16 %v624, %v623
      %v632 = vpack.c.b16 %v626, %v625
      %v633 = vpack.c.b16 %v628, %v627
      %v634 = vpack.c.b16 %v630, %v629
      %vm635 = vcmask 523264
      %v637 = vsel %vm635, %v631, 0
      %v640 = vsel %vm635, %v632, 0
      %v643 = vsel %vm635, %v633, 0
      %v646 = vsel %vm635, %v634, 0
      %648 = vmatprep.subr.bf16.mxu0 0
      %649 = vmatpush1.bf16.msra.mxu0 0
      %650 = vmatprep.subr.bf16.mxu0 0
      %651 = vmatpush1.bf16.msra.mxu0 0
      %652 = vmatprep.subr.bf16.mxu0 0
      %653 = vmatpush1.bf16.msra.mxu0 0
      %654 = vmatprep.subr.bf16.mxu0 0
      %655 = vmatpush1.bf16.msra.mxu0 0
      %656 = vmatprep.subr.bf16.mxu0 %v564
      %657 = vmatpush1.bf16.msra.mxu0 %v563
      %658 = vmatprep.subr.bf16.mxu0 %v560
      %659 = vmatpush1.bf16.msra.mxu0 %v559
      %660 = vmatprep.subr.bf16.mxu0 %v556
      %661 = vmatpush1.bf16.msra.mxu0 %v555
      %662 = vmatprep.subr.bf16.mxu0 %v552
      %663 = vmatpush1.bf16.msra.mxu0 %v551
      %664 = vmatprep.subr.bf16.mxu0 0
      %665 = vmatpush2.bf16.msra.mxu0 0
      %666 = vmatprep.subr.bf16.mxu0 0
      %667 = vmatpush2.bf16.msra.mxu0 0
      %668 = vmatprep.subr.bf16.mxu0 0
      %669 = vmatpush2.bf16.msra.mxu0 0
      %670 = vmatprep.subr.bf16.mxu0 0
      %671 = vmatpush2.bf16.msra.mxu0 0
      %672 = vmatprep.subr.bf16.mxu0 0
      %673 = vmatpush2.bf16.msra.mxu0 0
      %674 = vmatprep.subr.bf16.mxu0 0
      %675 = vmatpush2.bf16.msra.mxu0 0
      %676 = vmatprep.subr.bf16.mxu0 0
      %677 = vmatpush2.bf16.msra.mxu0 0
      %678 = vmatprep.subr.bf16.mxu0 0
      %679 = vmatpush2.bf16.msra.mxu0 0
      %680 = vmatprep.mubr.bf16.mxu0 0
      %681 = vmatmul.mubr.bf16.gmra.mxu0 %v637
      %v682 = vpop.f32.mrf.mxu0
      %v683 = vadd.f32 %v578, %v682
      %v684 = vpop.f32.mrf.mxu0
      %v685 = vadd.f32 %v578, %v684
      %v686 = vpop.f32.mrf.mxu0
      %v687 = vadd.f32 %v583, %v686
      %v688 = vpop.f32.mrf.mxu0
      %v689 = vadd.f32 %v583, %v688
      %690 = vmatprep.mubr.bf16.mxu0 0
      %691 = vmatmul.mubr.bf16.gmra.mxu0 %v640
      %v692 = vpop.f32.mrf.mxu0
      %v693 = vadd.f32 %v588, %v692
      %v694 = vpop.f32.mrf.mxu0
      %v695 = vadd.f32 %v588, %v694
      %v696 = vpop.f32.mrf.mxu0
      %v697 = vadd.f32 %v593, %v696
      %v698 = vpop.f32.mrf.mxu0
      %v699 = vadd.f32 %v593, %v698
      %700 = vmatprep.mubr.bf16.mxu0 0
      %701 = vmatmul.mubr.bf16.gmra.mxu0 %v643
      %v702 = vpop.f32.mrf.mxu0
      %v703 = vadd.f32 %v598, %v702
      %v704 = vpop.f32.mrf.mxu0
      %v705 = vadd.f32 %v598, %v704
      %v706 = vpop.f32.mrf.mxu0
      %v707 = vadd.f32 %v603, %v706
      %v708 = vpop.f32.mrf.mxu0
      %v709 = vadd.f32 %v603, %v708
      %710 = vmatprep.mubr.bf16.mxu0 0
      %711 = vmatmul.mubr.bf16.gmra.mxu0 %v646
      %v712 = vpop.f32.mrf.mxu0
      %v713 = vadd.f32 %v608, %v712
      %v714 = vpop.f32.mrf.mxu0
      %v715 = vadd.f32 %v608, %v714
      %v716 = vpop.f32.mrf.mxu0
      %v717 = vadd.f32 %v613, %v716
      %v718 = vpop.f32.mrf.mxu0
      %v719 = vadd.f32 %v613, %v718
      %720 = vdwg.mxu0
      %721 = vmatprep.subr.bf16.mxu0 0
      %722 = vmatpush1.bf16.msra.mxu0 0
      %723 = vmatprep.subr.bf16.mxu0 0
      %724 = vmatpush1.bf16.msra.mxu0 0
      %725 = vmatprep.subr.bf16.mxu0 0
      %726 = vmatpush1.bf16.msra.mxu0 0
      %727 = vmatprep.subr.bf16.mxu0 0
      %728 = vmatpush1.bf16.msra.mxu0 0
      %729 = vmatprep.subr.bf16.mxu0 %v566
      %730 = vmatpush1.bf16.msra.mxu0 %v565
      %731 = vmatprep.subr.bf16.mxu0 %v562
      %732 = vmatpush1.bf16.msra.mxu0 %v561
      %733 = vmatprep.subr.bf16.mxu0 %v558
      %734 = vmatpush1.bf16.msra.mxu0 %v557
      %735 = vmatprep.subr.bf16.mxu0 %v554
      %736 = vmatpush1.bf16.msra.mxu0 %v553
      %737 = vmatprep.subr.bf16.mxu0 0
      %738 = vmatpush2.bf16.msra.mxu0 0
      %739 = vmatprep.subr.bf16.mxu0 0
      %740 = vmatpush2.bf16.msra.mxu0 0
      %741 = vmatprep.subr.bf16.mxu0 0
      %742 = vmatpush2.bf16.msra.mxu0 0
      %743 = vmatprep.subr.bf16.mxu0 0
      %744 = vmatpush2.bf16.msra.mxu0 0
      %745 = vmatprep.subr.bf16.mxu0 0
      %746 = vmatpush2.bf16.msra.mxu0 0
      %747 = vmatprep.subr.bf16.mxu0 0
      %748 = vmatpush2.bf16.msra.mxu0 0
      %749 = vmatprep.subr.bf16.mxu0 0
      %750 = vmatpush2.bf16.msra.mxu0 0
      %751 = vmatprep.subr.bf16.mxu0 0
      %752 = vmatpush2.bf16.msra.mxu0 0
      %753 = vmatprep.mubr.bf16.mxu0 0
      %754 = vmatmul.mubr.bf16.gmra.mxu0 %v637
      %v755 = vpop.f32.mrf.mxu0
      %v756 = vadd.f32 %v578, %v755
      %v757 = vpop.f32.mrf.mxu0
      %v758 = vadd.f32 %v578, %v757
      %v759 = vpop.f32.mrf.mxu0
      %v760 = vadd.f32 %v583, %v759
      %v761 = vpop.f32.mrf.mxu0
      %v762 = vadd.f32 %v583, %v761
      %763 = vmatprep.mubr.bf16.mxu0 0
      %764 = vmatmul.mubr.bf16.gmra.mxu0 %v640
      %v765 = vpop.f32.mrf.mxu0
      %v766 = vadd.f32 %v588, %v765
      %v767 = vpop.f32.mrf.mxu0
      %v768 = vadd.f32 %v588, %v767
      %v769 = vpop.f32.mrf.mxu0
      %v770 = vadd.f32 %v593, %v769
      %v771 = vpop.f32.mrf.mxu0
      %v772 = vadd.f32 %v593, %v771
      %773 = vmatprep.mubr.bf16.mxu0 0
      %774 = vmatmul.mubr.bf16.gmra.mxu0 %v643
      %v775 = vpop.f32.mrf.mxu0
      %v776 = vadd.f32 %v598, %v775
      %v777 = vpop.f32.mrf.mxu0
      %v778 = vadd.f32 %v598, %v777
      %v779 = vpop.f32.mrf.mxu0
      %v780 = vadd.f32 %v603, %v779
      %v781 = vpop.f32.mrf.mxu0
      %v782 = vadd.f32 %v603, %v781
      %783 = vmatprep.mubr.bf16.mxu0 0
      %784 = vmatmul.mubr.bf16.gmra.mxu0 %v646
      %v785 = vpop.f32.mrf.mxu0
      %v786 = vadd.f32 %v608, %v785
      %v787 = vpop.f32.mrf.mxu0
      %v788 = vadd.f32 %v608, %v787
      %v789 = vpop.f32.mrf.mxu0
      %v790 = vadd.f32 %v613, %v789
      %v791 = vpop.f32.mrf.mxu0
      %v792 = vadd.f32 %v613, %v791
      %793 = vdwg.mxu0
      %v794 = vtanh.pop %v683
      %v795 = vtanh.pop %v685
      %v796 = vtanh.pop %v756
      %v797 = vtanh.pop %v758
      %v798 = vtanh.pop %v687
      %v799 = vtanh.pop %v689
      %v800 = vtanh.pop %v760
      %v801 = vtanh.pop %v762
      %v802 = vtanh.pop %v693
      %v803 = vtanh.pop %v695
      %v804 = vtanh.pop %v766
      %v805 = vtanh.pop %v768
      %v806 = vtanh.pop %v697
      %v807 = vtanh.pop %v699
      %v808 = vtanh.pop %v770
      %v809 = vtanh.pop %v772
      %v810 = vtanh.pop %v703
      %v811 = vtanh.pop %v705
      %v812 = vtanh.pop %v776
      %v813 = vtanh.pop %v778
      %v814 = vtanh.pop %v707
      %v815 = vtanh.pop %v709
      %v816 = vtanh.pop %v780
      %v817 = vtanh.pop %v782
      %v818 = vtanh.pop %v713
      %v819 = vtanh.pop %v715
      %v820 = vtanh.pop %v786
      %v821 = vtanh.pop %v788
      %v822 = vtanh.pop %v717
      %v823 = vtanh.pop %v719
      %v824 = vtanh.pop %v790
      %v825 = vtanh.pop %v792
      %s826 = scalar_lea.vmem %s3, 32
      %v827 = vld [vmem:[%s826] sm:$0xf]
      %v828 = vld [vmem:[%s826 + $0x4] sm:$0xf]
      %v829 = vld [vmem:[%s826 + $0x8] sm:$0xf]
      %v830 = vld [vmem:[%s826 + $0xc] sm:$0xf]
      %v831 = vld [vmem:[%s826 + $0x10] sm:$0xf]
      %v832 = vld [vmem:[%s826 + $0x14] sm:$0xf]
      %v833 = vld [vmem:[%s826 + $0x18] sm:$0xf]
      %v834 = vld [vmem:[%s826 + $0x1c] sm:$0xf]
      %v835 = vpack.c.bf16 %v798, %v794
      %v836 = vpack.c.bf16 %v799, %v795
      %v837 = vpack.c.bf16 %v800, %v796
      %v838 = vpack.c.bf16 %v801, %v797
      %v839 = vpack.c.bf16 %v806, %v802
      %v840 = vpack.c.bf16 %v807, %v803
      %v841 = vpack.c.bf16 %v808, %v804
      %v842 = vpack.c.bf16 %v809, %v805
      %v843 = vpack.c.bf16 %v814, %v810
      %v844 = vpack.c.bf16 %v815, %v811
      %v845 = vpack.c.bf16 %v816, %v812
      %v846 = vpack.c.bf16 %v817, %v813
      %v847 = vpack.c.bf16 %v822, %v818
      %v848 = vpack.c.bf16 %v823, %v819
      %v849 = vpack.c.bf16 %v824, %v820
      %v850 = vpack.c.bf16 %v825, %v821
      %s851 = scalar_lea.vmem %s4, 64
      %v852 = vld [vmem:[%s851] sm:$0xff]
      %v853 = vld [vmem:[%s851 + $0x8] sm:$0xff]
      %v854 = vld [vmem:[%s851 + $0x10] sm:$0xff]
      %v855 = vld [vmem:[%s851 + $0x18] sm:$0xff]
      %v856 = vld [vmem:[%s851 + $0x20] sm:$0xff]
      %v857 = vld [vmem:[%s851 + $0x28] sm:$0xff]
      %v858 = vld [vmem:[%s851 + $0x30] sm:$0xff]
      %v859 = vld [vmem:[%s851 + $0x38] sm:$0xff]
      %861 = vset.pattern.permute.xlu0 0
      %862 = vperm.xlu0 %861, %v852
      %v863 = vpop.permute.xlu0 %862
      %866 = vset.pattern.permute.xlu0 0
      %867 = vperm.xlu0 %866, %v853
      %v868 = vpop.permute.xlu0 %867
      %871 = vset.pattern.permute.xlu0 0
      %872 = vperm.xlu0 %871, %v854
      %v873 = vpop.permute.xlu0 %872
      %876 = vset.pattern.permute.xlu0 0
      %877 = vperm.xlu0 %876, %v855
      %v878 = vpop.permute.xlu0 %877
      %881 = vset.pattern.permute.xlu0 0
      %882 = vperm.xlu0 %881, %v856
      %v883 = vpop.permute.xlu0 %882
      %886 = vset.pattern.permute.xlu0 0
      %887 = vperm.xlu0 %886, %v857
      %v888 = vpop.permute.xlu0 %887
      %891 = vset.pattern.permute.xlu0 0
      %892 = vperm.xlu0 %891, %v858
      %v893 = vpop.permute.xlu0 %892
      %896 = vset.pattern.permute.xlu0 0
      %897 = vperm.xlu0 %896, %v859
      %v898 = vpop.permute.xlu0 %897
      %v908 = vunpack.c.l.b16 %v827
      %v909 = vunpack.c.l.b16 %v828
      %v910 = vunpack.c.l.b16 %v829
      %v911 = vunpack.c.l.b16 %v830
      %v912 = vunpack.c.l.b16 %v831
      %v913 = vunpack.c.l.b16 %v832
      %v914 = vunpack.c.l.b16 %v833
      %v915 = vunpack.c.l.b16 %v834
      %v916 = vpack.c.b16 %v909, %v908
      %v917 = vpack.c.b16 %v911, %v910
      %v918 = vpack.c.b16 %v913, %v912
      %v919 = vpack.c.b16 %v915, %v914
      %v921 = vsel %vm635, %v916, 0
      %v924 = vsel %vm635, %v917, 0
      %v927 = vsel %vm635, %v918, 0
      %v930 = vsel %vm635, %v919, 0
      %932 = vmatprep.subr.bf16.mxu0 0
      %933 = vmatpush1.bf16.msra.mxu0 0
      %934 = vmatprep.subr.bf16.mxu0 0
      %935 = vmatpush1.bf16.msra.mxu0 0
      %936 = vmatprep.subr.bf16.mxu0 0
      %937 = vmatpush1.bf16.msra.mxu0 0
      %938 = vmatprep.subr.bf16.mxu0 0
      %939 = vmatpush1.bf16.msra.mxu0 0
      %940 = vmatprep.subr.bf16.mxu0 %v848
      %941 = vmatpush1.bf16.msra.mxu0 %v847
      %942 = vmatprep.subr.bf16.mxu0 %v844
      %943 = vmatpush1.bf16.msra.mxu0 %v843
      %944 = vmatprep.subr.bf16.mxu0 %v840
      %945 = vmatpush1.bf16.msra.mxu0 %v839
      %946 = vmatprep.subr.bf16.mxu0 %v836
      %947 = vmatpush1.bf16.msra.mxu0 %v835
      %948 = vmatprep.subr.bf16.mxu0 0
      %949 = vmatpush2.bf16.msra.mxu0 0
      %950 = vmatprep.subr.bf16.mxu0 0
      %951 = vmatpush2.bf16.msra.mxu0 0
      %952 = vmatprep.subr.bf16.mxu0 0
      %953 = vmatpush2.bf16.msra.mxu0 0
      %954 = vmatprep.subr.bf16.mxu0 0
      %955 = vmatpush2.bf16.msra.mxu0 0
      %956 = vmatprep.subr.bf16.mxu0 0
      %957 = vmatpush2.bf16.msra.mxu0 0
      %958 = vmatprep.subr.bf16.mxu0 0
      %959 = vmatpush2.bf16.msra.mxu0 0
      %960 = vmatprep.subr.bf16.mxu0 0
      %961 = vmatpush2.bf16.msra.mxu0 0
      %962 = vmatprep.subr.bf16.mxu0 0
      %963 = vmatpush2.bf16.msra.mxu0 0
      %964 = vmatprep.mubr.bf16.mxu0 0
      %965 = vmatmul.mubr.bf16.gmra.mxu0 %v921
      %v966 = vpop.f32.mrf.mxu0
      %v967 = vadd.f32 %v863, %v966
      %v968 = vpop.f32.mrf.mxu0
      %v969 = vadd.f32 %v863, %v968
      %v970 = vpop.f32.mrf.mxu0
      %v971 = vadd.f32 %v868, %v970
      %v972 = vpop.f32.mrf.mxu0
      %v973 = vadd.f32 %v868, %v972
      %974 = vmatprep.mubr.bf16.mxu0 0
      %975 = vmatmul.mubr.bf16.gmra.mxu0 %v924
      %v976 = vpop.f32.mrf.mxu0
      %v977 = vadd.f32 %v873, %v976
      %v978 = vpop.f32.mrf.mxu0
      %v979 = vadd.f32 %v873, %v978
      %v980 = vpop.f32.mrf.mxu0
      %v981 = vadd.f32 %v878, %v980
      %v982 = vpop.f32.mrf.mxu0
      %v983 = vadd.f32 %v878, %v982
      %984 = vmatprep.mubr.bf16.mxu0 0
      %985 = vmatmul.mubr.bf16.gmra.mxu0 %v927
      %v986 = vpop.f32.mrf.mxu0
      %v987 = vadd.f32 %v883, %v986
      %v988 = vpop.f32.mrf.mxu0
      %v989 = vadd.f32 %v883, %v988
      %v990 = vpop.f32.mrf.mxu0
      %v991 = vadd.f32 %v888, %v990
      %v992 = vpop.f32.mrf.mxu0
      %v993 = vadd.f32 %v888, %v992
      %994 = vmatprep.mubr.bf16.mxu0 0
      %995 = vmatmul.mubr.bf16.gmra.mxu0 %v930
      %v996 = vpop.f32.mrf.mxu0
      %v997 = vadd.f32 %v893, %v996
      %v998 = vpop.f32.mrf.mxu0
      %v999 = vadd.f32 %v893, %v998
      %v1000 = vpop.f32.mrf.mxu0
      %v1001 = vadd.f32 %v898, %v1000
      %v1002 = vpop.f32.mrf.mxu0
      %v1003 = vadd.f32 %v898, %v1002
      %1004 = vdwg.mxu0
      %1005 = vmatprep.subr.bf16.mxu0 0
      %1006 = vmatpush1.bf16.msra.mxu0 0
      %1007 = vmatprep.subr.bf16.mxu0 0
      %1008 = vmatpush1.bf16.msra.mxu0 0
      %1009 = vmatprep.subr.bf16.mxu0 0
      %1010 = vmatpush1.bf16.msra.mxu0 0
      %1011 = vmatprep.subr.bf16.mxu0 0
      %1012 = vmatpush1.bf16.msra.mxu0 0
      %1013 = vmatprep.subr.bf16.mxu0 %v850
      %1014 = vmatpush1.bf16.msra.mxu0 %v849
      %1015 = vmatprep.subr.bf16.mxu0 %v846
      %1016 = vmatpush1.bf16.msra.mxu0 %v845
      %1017 = vmatprep.subr.bf16.mxu0 %v842
      %1018 = vmatpush1.bf16.msra.mxu0 %v841
      %1019 = vmatprep.subr.bf16.mxu0 %v838
      %1020 = vmatpush1.bf16.msra.mxu0 %v837
      %1021 = vmatprep.subr.bf16.mxu0 0
      %1022 = vmatpush2.bf16.msra.mxu0 0
      %1023 = vmatprep.subr.bf16.mxu0 0
      %1024 = vmatpush2.bf16.msra.mxu0 0
      %1025 = vmatprep.subr.bf16.mxu0 0
      %1026 = vmatpush2.bf16.msra.mxu0 0
      %1027 = vmatprep.subr.bf16.mxu0 0
      %1028 = vmatpush2.bf16.msra.mxu0 0
      %1029 = vmatprep.subr.bf16.mxu0 0
      %1030 = vmatpush2.bf16.msra.mxu0 0
      %1031 = vmatprep.subr.bf16.mxu0 0
      %1032 = vmatpush2.bf16.msra.mxu0 0
      %1033 = vmatprep.subr.bf16.mxu0 0
      %1034 = vmatpush2.bf16.msra.mxu0 0
      %1035 = vmatprep.subr.bf16.mxu0 0
      %1036 = vmatpush2.bf16.msra.mxu0 0
      %1037 = vmatprep.mubr.bf16.mxu0 0
      %1038 = vmatmul.mubr.bf16.gmra.mxu0 %v921
      %v1039 = vpop.f32.mrf.mxu0
      %v1040 = vadd.f32 %v863, %v1039
      %v1041 = vpop.f32.mrf.mxu0
      %v1042 = vadd.f32 %v863, %v1041
      %v1043 = vpop.f32.mrf.mxu0
      %v1044 = vadd.f32 %v868, %v1043
      %v1045 = vpop.f32.mrf.mxu0
      %v1046 = vadd.f32 %v868, %v1045
      %1047 = vmatprep.mubr.bf16.mxu0 0
      %1048 = vmatmul.mubr.bf16.gmra.mxu0 %v924
      %v1049 = vpop.f32.mrf.mxu0
      %v1050 = vadd.f32 %v873, %v1049
      %v1051 = vpop.f32.mrf.mxu0
      %v1052 = vadd.f32 %v873, %v1051
      %v1053 = vpop.f32.mrf.mxu0
      %v1054 = vadd.f32 %v878, %v1053
      %v1055 = vpop.f32.mrf.mxu0
      %v1056 = vadd.f32 %v878, %v1055
      %1057 = vmatprep.mubr.bf16.mxu0 0
      %1058 = vmatmul.mubr.bf16.gmra.mxu0 %v927
      %v1059 = vpop.f32.mrf.mxu0
      %v1060 = vadd.f32 %v883, %v1059
      %v1061 = vpop.f32.mrf.mxu0
      %v1062 = vadd.f32 %v883, %v1061
      %v1063 = vpop.f32.mrf.mxu0
      %v1064 = vadd.f32 %v888, %v1063
      %v1065 = vpop.f32.mrf.mxu0
      %v1066 = vadd.f32 %v888, %v1065
      %1067 = vmatprep.mubr.bf16.mxu0 0
      %1068 = vmatmul.mubr.bf16.gmra.mxu0 %v930
      %v1069 = vpop.f32.mrf.mxu0
      %v1070 = vadd.f32 %v893, %v1069
      %v1071 = vpop.f32.mrf.mxu0
      %v1072 = vadd.f32 %v893, %v1071
      %v1073 = vpop.f32.mrf.mxu0
      %v1074 = vadd.f32 %v898, %v1073
      %v1075 = vpop.f32.mrf.mxu0
      %v1076 = vadd.f32 %v898, %v1075
      %1077 = vdwg.mxu0
      %v1078 = vtanh.pop %v967
      %v1079 = vtanh.pop %v969
      %v1080 = vtanh.pop %v1040
      %v1081 = vtanh.pop %v1042
      %v1082 = vtanh.pop %v971
      %v1083 = vtanh.pop %v973
      %v1084 = vtanh.pop %v1044
      %v1085 = vtanh.pop %v1046
      %v1086 = vtanh.pop %v977
      %v1087 = vtanh.pop %v979
      %v1088 = vtanh.pop %v1050
      %v1089 = vtanh.pop %v1052
      %v1090 = vtanh.pop %v981
      %v1091 = vtanh.pop %v983
      %v1092 = vtanh.pop %v1054
      %v1093 = vtanh.pop %v1056
      %v1094 = vtanh.pop %v987
      %v1095 = vtanh.pop %v989
      %v1096 = vtanh.pop %v1060
      %v1097 = vtanh.pop %v1062
      %v1098 = vtanh.pop %v991
      %v1099 = vtanh.pop %v993
      %v1100 = vtanh.pop %v1064
      %v1101 = vtanh.pop %v1066
      %v1102 = vtanh.pop %v997
      %v1103 = vtanh.pop %v999
      %v1104 = vtanh.pop %v1070
      %v1105 = vtanh.pop %v1072
      %v1106 = vtanh.pop %v1001
      %v1107 = vtanh.pop %v1003
      %v1108 = vtanh.pop %v1074
      %v1109 = vtanh.pop %v1076
      %s1110 = scalar_lea.vmem %s3, 64
      %v1111 = vld [vmem:[%s1110] sm:$0xf]
      %v1112 = vld [vmem:[%s1110 + $0x4] sm:$0xf]
      %v1113 = vld [vmem:[%s1110 + $0x8] sm:$0xf]
      %v1114 = vld [vmem:[%s1110 + $0xc] sm:$0xf]
      %v1115 = vld [vmem:[%s1110 + $0x10] sm:$0xf]
      %v1116 = vld [vmem:[%s1110 + $0x14] sm:$0xf]
      %v1117 = vld [vmem:[%s1110 + $0x18] sm:$0xf]
      %v1118 = vld [vmem:[%s1110 + $0x1c] sm:$0xf]
      %v1119 = vpack.c.bf16 %v1082, %v1078
      %v1120 = vpack.c.bf16 %v1083, %v1079
      %v1121 = vpack.c.bf16 %v1084, %v1080
      %v1122 = vpack.c.bf16 %v1085, %v1081
      %v1123 = vpack.c.bf16 %v1090, %v1086
      %v1124 = vpack.c.bf16 %v1091, %v1087
      %v1125 = vpack.c.bf16 %v1092, %v1088
      %v1126 = vpack.c.bf16 %v1093, %v1089
      %v1127 = vpack.c.bf16 %v1098, %v1094
      %v1128 = vpack.c.bf16 %v1099, %v1095
      %v1129 = vpack.c.bf16 %v1100, %v1096
      %v1130 = vpack.c.bf16 %v1101, %v1097
      %v1131 = vpack.c.bf16 %v1106, %v1102
      %v1132 = vpack.c.bf16 %v1107, %v1103
      %v1133 = vpack.c.bf16 %v1108, %v1104
      %v1134 = vpack.c.bf16 %v1109, %v1105
      %s1135 = scalar_lea.vmem %s4, 128
      %v1136 = vld [vmem:[%s1135] sm:$0xff]
      %v1137 = vld [vmem:[%s1135 + $0x8] sm:$0xff]
      %v1138 = vld [vmem:[%s1135 + $0x10] sm:$0xff]
      %v1139 = vld [vmem:[%s1135 + $0x18] sm:$0xff]
      %v1140 = vld [vmem:[%s1135 + $0x20] sm:$0xff]
      %v1141 = vld [vmem:[%s1135 + $0x28] sm:$0xff]
      %v1142 = vld [vmem:[%s1135 + $0x30] sm:$0xff]
      %v1143 = vld [vmem:[%s1135 + $0x38] sm:$0xff]
      %1145 = vset.pattern.permute.xlu0 0
      %1146 = vperm.xlu0 %1145, %v1136
      %v1147 = vpop.permute.xlu0 %1146
      %1150 = vset.pattern.permute.xlu0 0
      %1151 = vperm.xlu0 %1150, %v1137
      %v1152 = vpop.permute.xlu0 %1151
      %1155 = vset.pattern.permute.xlu0 0
      %1156 = vperm.xlu0 %1155, %v1138
      %v1157 = vpop.permute.xlu0 %1156
      %1160 = vset.pattern.permute.xlu0 0
      %1161 = vperm.xlu0 %1160, %v1139
      %v1162 = vpop.permute.xlu0 %1161
      %1165 = vset.pattern.permute.xlu0 0
      %1166 = vperm.xlu0 %1165, %v1140
      %v1167 = vpop.permute.xlu0 %1166
      %1170 = vset.pattern.permute.xlu0 0
      %1171 = vperm.xlu0 %1170, %v1141
      %v1172 = vpop.permute.xlu0 %1171
      %1175 = vset.pattern.permute.xlu0 0
      %1176 = vperm.xlu0 %1175, %v1142
      %v1177 = vpop.permute.xlu0 %1176
      %1180 = vset.pattern.permute.xlu0 0
      %1181 = vperm.xlu0 %1180, %v1143
      %v1182 = vpop.permute.xlu0 %1181
      %v1192 = vunpack.c.l.b16 %v1111
      %v1193 = vunpack.c.l.b16 %v1112
      %v1194 = vunpack.c.l.b16 %v1113
      %v1195 = vunpack.c.l.b16 %v1114
      %v1196 = vunpack.c.l.b16 %v1115
      %v1197 = vunpack.c.l.b16 %v1116
      %v1198 = vunpack.c.l.b16 %v1117
      %v1199 = vunpack.c.l.b16 %v1118
      %v1200 = vpack.c.b16 %v1193, %v1192
      %v1201 = vpack.c.b16 %v1195, %v1194
      %v1202 = vpack.c.b16 %v1197, %v1196
      %v1203 = vpack.c.b16 %v1199, %v1198
      %v1205 = vsel %vm635, %v1200, 0
      %v1208 = vsel %vm635, %v1201, 0
      %v1211 = vsel %vm635, %v1202, 0
      %v1214 = vsel %vm635, %v1203, 0
      %1216 = vmatprep.subr.bf16.mxu0 0
      %1217 = vmatpush1.bf16.msra.mxu0 0
      %1218 = vmatprep.subr.bf16.mxu0 0
      %1219 = vmatpush1.bf16.msra.mxu0 0
      %1220 = vmatprep.subr.bf16.mxu0 0
      %1221 = vmatpush1.bf16.msra.mxu0 0
      %1222 = vmatprep.subr.bf16.mxu0 0
      %1223 = vmatpush1.bf16.msra.mxu0 0
      %1224 = vmatprep.subr.bf16.mxu0 %v1132
      %1225 = vmatpush1.bf16.msra.mxu0 %v1131
      %1226 = vmatprep.subr.bf16.mxu0 %v1128
      %1227 = vmatpush1.bf16.msra.mxu0 %v1127
      %1228 = vmatprep.subr.bf16.mxu0 %v1124
      %1229 = vmatpush1.bf16.msra.mxu0 %v1123
      %1230 = vmatprep.subr.bf16.mxu0 %v1120
      %1231 = vmatpush1.bf16.msra.mxu0 %v1119
      %1232 = vmatprep.subr.bf16.mxu0 0
      %1233 = vmatpush2.bf16.msra.mxu0 0
      %1234 = vmatprep.subr.bf16.mxu0 0
      %1235 = vmatpush2.bf16.msra.mxu0 0
      %1236 = vmatprep.subr.bf16.mxu0 0
      %1237 = vmatpush2.bf16.msra.mxu0 0
      %1238 = vmatprep.subr.bf16.mxu0 0
      %1239 = vmatpush2.bf16.msra.mxu0 0
      %1240 = vmatprep.subr.bf16.mxu0 0
      %1241 = vmatpush2.bf16.msra.mxu0 0
      %1242 = vmatprep.subr.bf16.mxu0 0
      %1243 = vmatpush2.bf16.msra.mxu0 0
      %1244 = vmatprep.subr.bf16.mxu0 0
      %1245 = vmatpush2.bf16.msra.mxu0 0
      %1246 = vmatprep.subr.bf16.mxu0 0
      %1247 = vmatpush2.bf16.msra.mxu0 0
      %1248 = vmatprep.mubr.bf16.mxu0 0
      %1249 = vmatmul.mubr.bf16.gmra.mxu0 %v1205
      %v1250 = vpop.f32.mrf.mxu0
      %v1251 = vadd.f32 %v1147, %v1250
      %v1252 = vpop.f32.mrf.mxu0
      %v1253 = vadd.f32 %v1147, %v1252
      %v1254 = vpop.f32.mrf.mxu0
      %v1255 = vadd.f32 %v1152, %v1254
      %v1256 = vpop.f32.mrf.mxu0
      %v1257 = vadd.f32 %v1152, %v1256
      %1258 = vmatprep.mubr.bf16.mxu0 0
      %1259 = vmatmul.mubr.bf16.gmra.mxu0 %v1208
      %v1260 = vpop.f32.mrf.mxu0
      %v1261 = vadd.f32 %v1157, %v1260
      %v1262 = vpop.f32.mrf.mxu0
      %v1263 = vadd.f32 %v1157, %v1262
      %v1264 = vpop.f32.mrf.mxu0
      %v1265 = vadd.f32 %v1162, %v1264
      %v1266 = vpop.f32.mrf.mxu0
      %v1267 = vadd.f32 %v1162, %v1266
      %1268 = vmatprep.mubr.bf16.mxu0 0
      %1269 = vmatmul.mubr.bf16.gmra.mxu0 %v1211
      %v1270 = vpop.f32.mrf.mxu0
      %v1271 = vadd.f32 %v1167, %v1270
      %v1272 = vpop.f32.mrf.mxu0
      %v1273 = vadd.f32 %v1167, %v1272
      %v1274 = vpop.f32.mrf.mxu0
      %v1275 = vadd.f32 %v1172, %v1274
      %v1276 = vpop.f32.mrf.mxu0
      %v1277 = vadd.f32 %v1172, %v1276
      %1278 = vmatprep.mubr.bf16.mxu0 0
      %1279 = vmatmul.mubr.bf16.gmra.mxu0 %v1214
      %v1280 = vpop.f32.mrf.mxu0
      %v1281 = vadd.f32 %v1177, %v1280
      %v1282 = vpop.f32.mrf.mxu0
      %v1283 = vadd.f32 %v1177, %v1282
      %v1284 = vpop.f32.mrf.mxu0
      %v1285 = vadd.f32 %v1182, %v1284
      %v1286 = vpop.f32.mrf.mxu0
      %v1287 = vadd.f32 %v1182, %v1286
      %1288 = vdwg.mxu0
      %1289 = vmatprep.subr.bf16.mxu0 0
      %1290 = vmatpush1.bf16.msra.mxu0 0
      %1291 = vmatprep.subr.bf16.mxu0 0
      %1292 = vmatpush1.bf16.msra.mxu0 0
      %1293 = vmatprep.subr.bf16.mxu0 0
      %1294 = vmatpush1.bf16.msra.mxu0 0
      %1295 = vmatprep.subr.bf16.mxu0 0
      %1296 = vmatpush1.bf16.msra.mxu0 0
      %1297 = vmatprep.subr.bf16.mxu0 %v1134
      %1298 = vmatpush1.bf16.msra.mxu0 %v1133
      %1299 = vmatprep.subr.bf16.mxu0 %v1130
      %1300 = vmatpush1.bf16.msra.mxu0 %v1129
      %1301 = vmatprep.subr.bf16.mxu0 %v1126
      %1302 = vmatpush1.bf16.msra.mxu0 %v1125
      %1303 = vmatprep.subr.bf16.mxu0 %v1122
      %1304 = vmatpush1.bf16.msra.mxu0 %v1121
      %1305 = vmatprep.subr.bf16.mxu0 0
      %1306 = vmatpush2.bf16.msra.mxu0 0
      %1307 = vmatprep.subr.bf16.mxu0 0
      %1308 = vmatpush2.bf16.msra.mxu0 0
      %1309 = vmatprep.subr.bf16.mxu0 0
      %1310 = vmatpush2.bf16.msra.mxu0 0
      %1311 = vmatprep.subr.bf16.mxu0 0
      %1312 = vmatpush2.bf16.msra.mxu0 0
      %1313 = vmatprep.subr.bf16.mxu0 0
      %1314 = vmatpush2.bf16.msra.mxu0 0
      %1315 = vmatprep.subr.bf16.mxu0 0
      %1316 = vmatpush2.bf16.msra.mxu0 0
      %1317 = vmatprep.subr.bf16.mxu0 0
      %1318 = vmatpush2.bf16.msra.mxu0 0
      %1319 = vmatprep.subr.bf16.mxu0 0
      %1320 = vmatpush2.bf16.msra.mxu0 0
      %1321 = vmatprep.mubr.bf16.mxu0 0
      %1322 = vmatmul.mubr.bf16.gmra.mxu0 %v1205
      %v1323 = vpop.f32.mrf.mxu0
      %v1324 = vadd.f32 %v1147, %v1323
      %v1325 = vpop.f32.mrf.mxu0
      %v1326 = vadd.f32 %v1147, %v1325
      %v1327 = vpop.f32.mrf.mxu0
      %v1328 = vadd.f32 %v1152, %v1327
      %v1329 = vpop.f32.mrf.mxu0
      %v1330 = vadd.f32 %v1152, %v1329
      %1331 = vmatprep.mubr.bf16.mxu0 0
      %1332 = vmatmul.mubr.bf16.gmra.mxu0 %v1208
      %v1333 = vpop.f32.mrf.mxu0
      %v1334 = vadd.f32 %v1157, %v1333
      %v1335 = vpop.f32.mrf.mxu0
      %v1336 = vadd.f32 %v1157, %v1335
      %v1337 = vpop.f32.mrf.mxu0
      %v1338 = vadd.f32 %v1162, %v1337
      %v1339 = vpop.f32.mrf.mxu0
      %v1340 = vadd.f32 %v1162, %v1339
      %1341 = vmatprep.mubr.bf16.mxu0 0
      %1342 = vmatmul.mubr.bf16.gmra.mxu0 %v1211
      %v1343 = vpop.f32.mrf.mxu0
      %v1344 = vadd.f32 %v1167, %v1343
      %v1345 = vpop.f32.mrf.mxu0
      %v1346 = vadd.f32 %v1167, %v1345
      %v1347 = vpop.f32.mrf.mxu0
      %v1348 = vadd.f32 %v1172, %v1347
      %v1349 = vpop.f32.mrf.mxu0
      %v1350 = vadd.f32 %v1172, %v1349
      %1351 = vmatprep.mubr.bf16.mxu0 0
      %1352 = vmatmul.mubr.bf16.gmra.mxu0 %v1214
      %v1353 = vpop.f32.mrf.mxu0
      %v1354 = vadd.f32 %v1177, %v1353
      %v1355 = vpop.f32.mrf.mxu0
      %v1356 = vadd.f32 %v1177, %v1355
      %v1357 = vpop.f32.mrf.mxu0
      %v1358 = vadd.f32 %v1182, %v1357
      %v1359 = vpop.f32.mrf.mxu0
      %v1360 = vadd.f32 %v1182, %v1359
      %1361 = vdwg.mxu0
      %v1362 = vtanh.pop %v1251
      %v1363 = vtanh.pop %v1253
      %v1364 = vtanh.pop %v1324
      %v1365 = vtanh.pop %v1326
      %v1366 = vtanh.pop %v1255
      %v1367 = vtanh.pop %v1257
      %v1368 = vtanh.pop %v1328
      %v1369 = vtanh.pop %v1330
      %v1370 = vtanh.pop %v1261
      %v1371 = vtanh.pop %v1263
      %v1372 = vtanh.pop %v1334
      %v1373 = vtanh.pop %v1336
      %v1374 = vtanh.pop %v1265
      %v1375 = vtanh.pop %v1267
      %v1376 = vtanh.pop %v1338
      %v1377 = vtanh.pop %v1340
      %v1378 = vtanh.pop %v1271
      %v1379 = vtanh.pop %v1273
      %v1380 = vtanh.pop %v1344
      %v1381 = vtanh.pop %v1346
      %v1382 = vtanh.pop %v1275
      %v1383 = vtanh.pop %v1277
      %v1384 = vtanh.pop %v1348
      %v1385 = vtanh.pop %v1350
      %v1386 = vtanh.pop %v1281
      %v1387 = vtanh.pop %v1283
      %v1388 = vtanh.pop %v1354
      %v1389 = vtanh.pop %v1356
      %v1390 = vtanh.pop %v1285
      %v1391 = vtanh.pop %v1287
      %v1392 = vtanh.pop %v1358
      %v1393 = vtanh.pop %v1360
      %s1394 = scalar_lea.vmem %s3, 96
      %v1395 = vld [vmem:[%s1394] sm:$0xf]
      %v1396 = vld [vmem:[%s1394 + $0x4] sm:$0xf]
      %v1397 = vld [vmem:[%s1394 + $0x8] sm:$0xf]
      %v1398 = vld [vmem:[%s1394 + $0xc] sm:$0xf]
      %v1399 = vld [vmem:[%s1394 + $0x10] sm:$0xf]
      %v1400 = vld [vmem:[%s1394 + $0x14] sm:$0xf]
      %v1401 = vld [vmem:[%s1394 + $0x18] sm:$0xf]
      %v1402 = vld [vmem:[%s1394 + $0x1c] sm:$0xf]
      %v1403 = vpack.c.bf16 %v1366, %v1362
      %v1404 = vpack.c.bf16 %v1367, %v1363
      %v1405 = vpack.c.bf16 %v1368, %v1364
      %v1406 = vpack.c.bf16 %v1369, %v1365
      %v1407 = vpack.c.bf16 %v1374, %v1370
      %v1408 = vpack.c.bf16 %v1375, %v1371
      %v1409 = vpack.c.bf16 %v1376, %v1372
      %v1410 = vpack.c.bf16 %v1377, %v1373
      %v1411 = vpack.c.bf16 %v1382, %v1378
      %v1412 = vpack.c.bf16 %v1383, %v1379
      %v1413 = vpack.c.bf16 %v1384, %v1380
      %v1414 = vpack.c.bf16 %v1385, %v1381
      %v1415 = vpack.c.bf16 %v1390, %v1386
      %v1416 = vpack.c.bf16 %v1391, %v1387
      %v1417 = vpack.c.bf16 %v1392, %v1388
      %v1418 = vpack.c.bf16 %v1393, %v1389
      %s1419 = scalar_lea.vmem %s4, 192
      %v1420 = vld [vmem:[%s1419] sm:$0xff]
      %v1421 = vld [vmem:[%s1419 + $0x8] sm:$0xff]
      %v1422 = vld [vmem:[%s1419 + $0x10] sm:$0xff]
      %v1423 = vld [vmem:[%s1419 + $0x18] sm:$0xff]
      %v1424 = vld [vmem:[%s1419 + $0x20] sm:$0xff]
      %v1425 = vld [vmem:[%s1419 + $0x28] sm:$0xff]
      %v1426 = vld [vmem:[%s1419 + $0x30] sm:$0xff]
      %v1427 = vld [vmem:[%s1419 + $0x38] sm:$0xff]
      %1429 = vset.pattern.permute.xlu0 0
      %1430 = vperm.xlu0 %1429, %v1420
      %v1431 = vpop.permute.xlu0 %1430
      %1434 = vset.pattern.permute.xlu0 0
      %1435 = vperm.xlu0 %1434, %v1421
      %v1436 = vpop.permute.xlu0 %1435
      %1439 = vset.pattern.permute.xlu0 0
      %1440 = vperm.xlu0 %1439, %v1422
      %v1441 = vpop.permute.xlu0 %1440
      %1444 = vset.pattern.permute.xlu0 0
      %1445 = vperm.xlu0 %1444, %v1423
      %v1446 = vpop.permute.xlu0 %1445
      %1449 = vset.pattern.permute.xlu0 0
      %1450 = vperm.xlu0 %1449, %v1424
      %v1451 = vpop.permute.xlu0 %1450
      %1454 = vset.pattern.permute.xlu0 0
      %1455 = vperm.xlu0 %1454, %v1425
      %v1456 = vpop.permute.xlu0 %1455
      %1459 = vset.pattern.permute.xlu0 0
      %1460 = vperm.xlu0 %1459, %v1426
      %v1461 = vpop.permute.xlu0 %1460
      %1464 = vset.pattern.permute.xlu0 0
      %1465 = vperm.xlu0 %1464, %v1427
      %v1466 = vpop.permute.xlu0 %1465
      %v1476 = vunpack.c.l.b16 %v1395
      %v1477 = vunpack.c.l.b16 %v1396
      %v1478 = vunpack.c.l.b16 %v1397
      %v1479 = vunpack.c.l.b16 %v1398
      %v1480 = vunpack.c.l.b16 %v1399
      %v1481 = vunpack.c.l.b16 %v1400
      %v1482 = vunpack.c.l.b16 %v1401
      %v1483 = vunpack.c.l.b16 %v1402
      %v1484 = vpack.c.b16 %v1477, %v1476
      %v1485 = vpack.c.b16 %v1479, %v1478
      %v1486 = vpack.c.b16 %v1481, %v1480
      %v1487 = vpack.c.b16 %v1483, %v1482
      %v1489 = vsel %vm635, %v1484, 0
      %v1492 = vsel %vm635, %v1485, 0
      %v1495 = vsel %vm635, %v1486, 0
      %v1498 = vsel %vm635, %v1487, 0
      %1500 = vmatprep.subr.bf16.mxu0 0
      %1501 = vmatpush1.bf16.msra.mxu0 0
      %1502 = vmatprep.subr.bf16.mxu0 0
      %1503 = vmatpush1.bf16.msra.mxu0 0
      %1504 = vmatprep.subr.bf16.mxu0 0
      %1505 = vmatpush1.bf16.msra.mxu0 0
      %1506 = vmatprep.subr.bf16.mxu0 0
      %1507 = vmatpush1.bf16.msra.mxu0 0
      %1508 = vmatprep.subr.bf16.mxu0 %v1416
      %1509 = vmatpush1.bf16.msra.mxu0 %v1415
      %1510 = vmatprep.subr.bf16.mxu0 %v1412
      %1511 = vmatpush1.bf16.msra.mxu0 %v1411
      %1512 = vmatprep.subr.bf16.mxu0 %v1408
      %1513 = vmatpush1.bf16.msra.mxu0 %v1407
      %1514 = vmatprep.subr.bf16.mxu0 %v1404
      %1515 = vmatpush1.bf16.msra.mxu0 %v1403
      %1516 = vmatprep.subr.bf16.mxu0 0
      %1517 = vmatpush2.bf16.msra.mxu0 0
      %1518 = vmatprep.subr.bf16.mxu0 0
      %1519 = vmatpush2.bf16.msra.mxu0 0
      %1520 = vmatprep.subr.bf16.mxu0 0
      %1521 = vmatpush2.bf16.msra.mxu0 0
      %1522 = vmatprep.subr.bf16.mxu0 0
      %1523 = vmatpush2.bf16.msra.mxu0 0
      %1524 = vmatprep.subr.bf16.mxu0 0
      %1525 = vmatpush2.bf16.msra.mxu0 0
      %1526 = vmatprep.subr.bf16.mxu0 0
      %1527 = vmatpush2.bf16.msra.mxu0 0
      %1528 = vmatprep.subr.bf16.mxu0 0
      %1529 = vmatpush2.bf16.msra.mxu0 0
      %1530 = vmatprep.subr.bf16.mxu0 0
      %1531 = vmatpush2.bf16.msra.mxu0 0
      %1532 = vmatprep.mubr.bf16.mxu0 0
      %1533 = vmatmul.mubr.bf16.gmra.mxu0 %v1489
      %v1534 = vpop.f32.mrf.mxu0
      %v1535 = vadd.f32 %v1431, %v1534
      %v1536 = vpop.f32.mrf.mxu0
      %v1537 = vadd.f32 %v1431, %v1536
      %v1538 = vpop.f32.mrf.mxu0
      %v1539 = vadd.f32 %v1436, %v1538
      %v1540 = vpop.f32.mrf.mxu0
      %v1541 = vadd.f32 %v1436, %v1540
      %1542 = vmatprep.mubr.bf16.mxu0 0
      %1543 = vmatmul.mubr.bf16.gmra.mxu0 %v1492
      %v1544 = vpop.f32.mrf.mxu0
      %v1545 = vadd.f32 %v1441, %v1544
      %v1546 = vpop.f32.mrf.mxu0
      %v1547 = vadd.f32 %v1441, %v1546
      %v1548 = vpop.f32.mrf.mxu0
      %v1549 = vadd.f32 %v1446, %v1548
      %v1550 = vpop.f32.mrf.mxu0
      %v1551 = vadd.f32 %v1446, %v1550
      %1552 = vmatprep.mubr.bf16.mxu0 0
      %1553 = vmatmul.mubr.bf16.gmra.mxu0 %v1495
      %v1554 = vpop.f32.mrf.mxu0
      %v1555 = vadd.f32 %v1451, %v1554
      %v1556 = vpop.f32.mrf.mxu0
      %v1557 = vadd.f32 %v1451, %v1556
      %v1558 = vpop.f32.mrf.mxu0
      %v1559 = vadd.f32 %v1456, %v1558
      %v1560 = vpop.f32.mrf.mxu0
      %v1561 = vadd.f32 %v1456, %v1560
      %1562 = vmatprep.mubr.bf16.mxu0 0
      %1563 = vmatmul.mubr.bf16.gmra.mxu0 %v1498
      %v1564 = vpop.f32.mrf.mxu0
      %v1565 = vadd.f32 %v1461, %v1564
      %v1566 = vpop.f32.mrf.mxu0
      %v1567 = vadd.f32 %v1461, %v1566
      %v1568 = vpop.f32.mrf.mxu0
      %v1569 = vadd.f32 %v1466, %v1568
      %v1570 = vpop.f32.mrf.mxu0
      %v1571 = vadd.f32 %v1466, %v1570
      %1572 = vdwg.mxu0
      %1573 = vmatprep.subr.bf16.mxu0 0
      %1574 = vmatpush1.bf16.msra.mxu0 0
      %1575 = vmatprep.subr.bf16.mxu0 0
      %1576 = vmatpush1.bf16.msra.mxu0 0
      %1577 = vmatprep.subr.bf16.mxu0 0
      %1578 = vmatpush1.bf16.msra.mxu0 0
      %1579 = vmatprep.subr.bf16.mxu0 0
      %1580 = vmatpush1.bf16.msra.mxu0 0
      %1581 = vmatprep.subr.bf16.mxu0 %v1418
      %1582 = vmatpush1.bf16.msra.mxu0 %v1417
      %1583 = vmatprep.subr.bf16.mxu0 %v1414
      %1584 = vmatpush1.bf16.msra.mxu0 %v1413
      %1585 = vmatprep.subr.bf16.mxu0 %v1410
      %1586 = vmatpush1.bf16.msra.mxu0 %v1409
      %1587 = vmatprep.subr.bf16.mxu0 %v1406
      %1588 = vmatpush1.bf16.msra.mxu0 %v1405
      %1589 = vmatprep.subr.bf16.mxu0 0
      %1590 = vmatpush2.bf16.msra.mxu0 0
      %1591 = vmatprep.subr.bf16.mxu0 0
      %1592 = vmatpush2.bf16.msra.mxu0 0
      %1593 = vmatprep.subr.bf16.mxu0 0
      %1594 = vmatpush2.bf16.msra.mxu0 0
      %1595 = vmatprep.subr.bf16.mxu0 0
      %1596 = vmatpush2.bf16.msra.mxu0 0
      %1597 = vmatprep.subr.bf16.mxu0 0
      %1598 = vmatpush2.bf16.msra.mxu0 0
      %1599 = vmatprep.subr.bf16.mxu0 0
      %1600 = vmatpush2.bf16.msra.mxu0 0
      %1601 = vmatprep.subr.bf16.mxu0 0
      %1602 = vmatpush2.bf16.msra.mxu0 0
      %1603 = vmatprep.subr.bf16.mxu0 0
      %1604 = vmatpush2.bf16.msra.mxu0 0
      %1605 = vmatprep.mubr.bf16.mxu0 0
      %1606 = vmatmul.mubr.bf16.gmra.mxu0 %v1489
      %v1607 = vpop.f32.mrf.mxu0
      %v1608 = vadd.f32 %v1431, %v1607
      %v1609 = vpop.f32.mrf.mxu0
      %v1610 = vadd.f32 %v1431, %v1609
      %v1611 = vpop.f32.mrf.mxu0
      %v1612 = vadd.f32 %v1436, %v1611
      %v1613 = vpop.f32.mrf.mxu0
      %v1614 = vadd.f32 %v1436, %v1613
      %1615 = vmatprep.mubr.bf16.mxu0 0
      %1616 = vmatmul.mubr.bf16.gmra.mxu0 %v1492
      %v1617 = vpop.f32.mrf.mxu0
      %v1618 = vadd.f32 %v1441, %v1617
      %v1619 = vpop.f32.mrf.mxu0
      %v1620 = vadd.f32 %v1441, %v1619
      %v1621 = vpop.f32.mrf.mxu0
      %v1622 = vadd.f32 %v1446, %v1621
      %v1623 = vpop.f32.mrf.mxu0
      %v1624 = vadd.f32 %v1446, %v1623
      %1625 = vmatprep.mubr.bf16.mxu0 0
      %1626 = vmatmul.mubr.bf16.gmra.mxu0 %v1495
      %v1627 = vpop.f32.mrf.mxu0
      %v1628 = vadd.f32 %v1451, %v1627
      %v1629 = vpop.f32.mrf.mxu0
      %v1630 = vadd.f32 %v1451, %v1629
      %v1631 = vpop.f32.mrf.mxu0
      %v1632 = vadd.f32 %v1456, %v1631
      %v1633 = vpop.f32.mrf.mxu0
      %v1634 = vadd.f32 %v1456, %v1633
      %1635 = vmatprep.mubr.bf16.mxu0 0
      %1636 = vmatmul.mubr.bf16.gmra.mxu0 %v1498
      %v1637 = vpop.f32.mrf.mxu0
      %v1638 = vadd.f32 %v1461, %v1637
      %v1639 = vpop.f32.mrf.mxu0
      %v1640 = vadd.f32 %v1461, %v1639
      %v1641 = vpop.f32.mrf.mxu0
      %v1642 = vadd.f32 %v1466, %v1641
      %v1643 = vpop.f32.mrf.mxu0
      %v1644 = vadd.f32 %v1466, %v1643
      %1645 = vdwg.mxu0
      %v1646 = vtanh.pop %v1535
      %v1647 = vtanh.pop %v1537
      %v1648 = vtanh.pop %v1608
      %v1649 = vtanh.pop %v1610
      %v1650 = vtanh.pop %v1539
      %v1651 = vtanh.pop %v1541
      %v1652 = vtanh.pop %v1612
      %v1653 = vtanh.pop %v1614
      %v1654 = vtanh.pop %v1545
      %v1655 = vtanh.pop %v1547
      %v1656 = vtanh.pop %v1618
      %v1657 = vtanh.pop %v1620
      %v1658 = vtanh.pop %v1549
      %v1659 = vtanh.pop %v1551
      %v1660 = vtanh.pop %v1622
      %v1661 = vtanh.pop %v1624
      %v1662 = vtanh.pop %v1555
      %v1663 = vtanh.pop %v1557
      %v1664 = vtanh.pop %v1628
      %v1665 = vtanh.pop %v1630
      %v1666 = vtanh.pop %v1559
      %v1667 = vtanh.pop %v1561
      %v1668 = vtanh.pop %v1632
      %v1669 = vtanh.pop %v1634
      %v1670 = vtanh.pop %v1565
      %v1671 = vtanh.pop %v1567
      %v1672 = vtanh.pop %v1638
      %v1673 = vtanh.pop %v1640
      %v1674 = vtanh.pop %v1569
      %v1675 = vtanh.pop %v1571
      %v1676 = vtanh.pop %v1642
      %v1677 = vtanh.pop %v1644
      %v1678 = vld [vmem:[%s5] sm:$0xf]
      %v1679 = vpack.c.bf16 %v1650, %v1646
      %v1680 = vpack.c.bf16 %v1651, %v1647
      %v1681 = vpack.c.bf16 %v1652, %v1648
      %v1682 = vpack.c.bf16 %v1653, %v1649
      %v1683 = vpack.c.bf16 %v1658, %v1654
      %v1684 = vpack.c.bf16 %v1659, %v1655
      %v1685 = vpack.c.bf16 %v1660, %v1656
      %v1686 = vpack.c.bf16 %v1661, %v1657
      %v1687 = vpack.c.bf16 %v1666, %v1662
      %v1688 = vpack.c.bf16 %v1667, %v1663
      %v1689 = vpack.c.bf16 %v1668, %v1664
      %v1690 = vpack.c.bf16 %v1669, %v1665
      %v1691 = vpack.c.bf16 %v1674, %v1670
      %v1692 = vpack.c.bf16 %v1675, %v1671
      %v1693 = vpack.c.bf16 %v1676, %v1672
      %v1694 = vpack.c.bf16 %v1677, %v1673
      %v1695 = vld [vmem:[%s6] sm:$0xff]
      %1697 = vset.pattern.permute.xlu0 0
      %1698 = vperm.xlu0 %1697, %v1695
      %v1699 = vpop.permute.xlu0 %1698
      %v1702 = vsel %vm635, %v1678, 0
      %1704 = vmatprep.subr.bf16.mxu0 0
      %1705 = vmatpush1.bf16.msra.mxu0 0
      %1706 = vmatprep.subr.bf16.mxu0 0
      %1707 = vmatpush1.bf16.msra.mxu0 0
      %1708 = vmatprep.subr.bf16.mxu0 0
      %1709 = vmatpush1.bf16.msra.mxu0 0
      %1710 = vmatprep.subr.bf16.mxu0 0
      %1711 = vmatpush1.bf16.msra.mxu0 0
      %1712 = vmatprep.subr.bf16.mxu0 %v1692
      %1713 = vmatpush1.bf16.msra.mxu0 %v1691
      %1714 = vmatprep.subr.bf16.mxu0 %v1688
      %1715 = vmatpush1.bf16.msra.mxu0 %v1687
      %1716 = vmatprep.subr.bf16.mxu0 %v1684
      %1717 = vmatpush1.bf16.msra.mxu0 %v1683
      %1718 = vmatprep.subr.bf16.mxu0 %v1680
      %1719 = vmatpush1.bf16.msra.mxu0 %v1679
      %1720 = vmatprep.subr.bf16.mxu0 0
      %1721 = vmatpush2.bf16.msra.mxu0 0
      %1722 = vmatprep.subr.bf16.mxu0 0
      %1723 = vmatpush2.bf16.msra.mxu0 0
      %1724 = vmatprep.subr.bf16.mxu0 0
      %1725 = vmatpush2.bf16.msra.mxu0 0
      %1726 = vmatprep.subr.bf16.mxu0 0
      %1727 = vmatpush2.bf16.msra.mxu0 0
      %1728 = vmatprep.subr.bf16.mxu0 0
      %1729 = vmatpush2.bf16.msra.mxu0 0
      %1730 = vmatprep.subr.bf16.mxu0 0
      %1731 = vmatpush2.bf16.msra.mxu0 0
      %1732 = vmatprep.subr.bf16.mxu0 0
      %1733 = vmatpush2.bf16.msra.mxu0 0
      %1734 = vmatprep.subr.bf16.mxu0 0
      %1735 = vmatpush2.bf16.msra.mxu0 0
      %1736 = vmatprep.mubr.bf16.mxu0 0
      %1737 = vmatmul.mubr.bf16.gmra.mxu0 %v1702
      %v1738 = vpop.f32.mrf.mxu0
      %v1739 = vadd.f32 %v1699, %v1738
      %v1740 = vpop.f32.mrf.mxu0
      %v1741 = vadd.f32 %v1699, %v1740
      %v1742 = vpop.f32.mrf.mxu0
      %v1743 = vpop.f32.mrf.mxu0
      %1744 = vdwg.mxu0
      %1745 = vmatprep.subr.bf16.mxu0 0
      %1746 = vmatpush1.bf16.msra.mxu0 0
      %1747 = vmatprep.subr.bf16.mxu0 0
      %1748 = vmatpush1.bf16.msra.mxu0 0
      %1749 = vmatprep.subr.bf16.mxu0 0
      %1750 = vmatpush1.bf16.msra.mxu0 0
      %1751 = vmatprep.subr.bf16.mxu0 0
      %1752 = vmatpush1.bf16.msra.mxu0 0
      %1753 = vmatprep.subr.bf16.mxu0 %v1694
      %1754 = vmatpush1.bf16.msra.mxu0 %v1693
      %1755 = vmatprep.subr.bf16.mxu0 %v1690
      %1756 = vmatpush1.bf16.msra.mxu0 %v1689
      %1757 = vmatprep.subr.bf16.mxu0 %v1686
      %1758 = vmatpush1.bf16.msra.mxu0 %v1685
      %1759 = vmatprep.subr.bf16.mxu0 %v1682
      %1760 = vmatpush1.bf16.msra.mxu0 %v1681
      %1761 = vmatprep.subr.bf16.mxu0 0
      %1762 = vmatpush2.bf16.msra.mxu0 0
      %1763 = vmatprep.subr.bf16.mxu0 0
      %1764 = vmatpush2.bf16.msra.mxu0 0
      %1765 = vmatprep.subr.bf16.mxu0 0
      %1766 = vmatpush2.bf16.msra.mxu0 0
      %1767 = vmatprep.subr.bf16.mxu0 0
      %1768 = vmatpush2.bf16.msra.mxu0 0
      %1769 = vmatprep.subr.bf16.mxu0 0
      %1770 = vmatpush2.bf16.msra.mxu0 0
      %1771 = vmatprep.subr.bf16.mxu0 0
      %1772 = vmatpush2.bf16.msra.mxu0 0
      %1773 = vmatprep.subr.bf16.mxu0 0
      %1774 = vmatpush2.bf16.msra.mxu0 0
      %1775 = vmatprep.subr.bf16.mxu0 0
      %1776 = vmatpush2.bf16.msra.mxu0 0
      %1777 = vmatprep.mubr.bf16.mxu0 0
      %1778 = vmatmul.mubr.bf16.gmra.mxu0 %v1702
      %v1779 = vpop.f32.mrf.mxu0
      %v1780 = vadd.f32 %v1699, %v1779
      %v1781 = vpop.f32.mrf.mxu0
      %v1782 = vadd.f32 %v1699, %v1781
      %v1783 = vpop.f32.mrf.mxu0
      %v1784 = vpop.f32.mrf.mxu0
      %1785 = vdwg.mxu0
      %1786 = vst [vmem:[%s280] sm:$0xff] %v1739
      %1787 = vst [vmem:[%s280 + $0x8] sm:$0xff] %v1741
      %1788 = vst [vmem:[%s280 + $0x10] sm:$0xff] %v1780
      %1789 = vst [vmem:[%s280 + $0x18] sm:$0xff] %v1782
      %s1790 = smul.u32 4, %s18
      %p1791 = scmp.lt.s32.totalorder %s1790, 7
      %s1792 = scalar_select %p1791, %s1790, 7
      %s1793 = smul.addr %s1792, 8
      %s1794 = scalar_lea.vmem %s7, %s1793
      // Predicated region
      $region49: #{pinn_forward.1} parent=47 // pred_check
        %p1795 = pneg %p188
      $region50: #{pinn_forward.1} parent=47 // pred_check_branch
        %1797 = sbr.rel (%p1795) target = $region52
      $region51: #{pinn_forward.1} parent=47 // pred_region
        %s1798 = smul.u32 4, %s18
      $region52: #{pinn_forward.1} parent=47 // pred_fallthru
        _
    $region48: #{pinn_forward.1} parent=5 // pred_fallthru
      _
    %p1799 = scmp.le.s32.totalorder 2, %s13
    // Predicated region
    $region53: #{pinn_forward.1} parent=5 // pred_check
      %p1800 = pneg %p1799
    $region54: #{pinn_forward.1} parent=5 // pred_check_branch
      %1802 = sbr.rel (%p1800) target = $region56
    $region55: #{pinn_forward.1} parent=5 // pred_region
      %s1803 = ssub.s32 %s13, 2
      // Predicated region
      $region57: #{pinn_forward.1} parent=55 // pred_check
        %p1804 = pneg %p194
      $region58: #{pinn_forward.1} parent=55 // pred_check_branch
        %1806 = sbr.rel (%p1804) target = $region60
      $region59: #{pinn_forward.1} parent=55 // pred_region
        %s1807 = smul.u32 4, %s19
        %p1808 = scmp.lt.s32.totalorder %s1807, 7
        %s1809 = scalar_select %p1808, %s1807, 7
        %s1810 = smul.addr %s1809, 8
        %s1811 = scalar_lea.vmem %s7, %s1810
      $region60: #{pinn_forward.1} parent=55 // pred_fallthru
        _
    $region56: #{pinn_forward.1} parent=5 // pred_fallthru
      _
  $region6: #{pinn_forward.1} parent=0 // loop_footer
    %s17 = sadd.s32 1, %s13
  $region7: #{pinn_forward.1} parent=0 // loop_footer_branch
    %12 = sbr.rel target = $region3
  $region8: #{pinn_forward.1} parent=0 // loop_exit
    _

</llo_original>
